<compile_context>
chip_gen: v7x
topology: tpu7x:2x2x1
jax: 0.10.0
libtpu: 0.0.40
codegen_flags: <defaults>
</compile_context>

<pallas_src>
import functools

import jax
import jax.numpy as jnp
import numpy as np
from jax.experimental import pallas as pl
from jax.experimental.pallas import tpu as pltpu

EPS = 1e-5                        # nn.GroupNorm default
_VMEM_LIMIT = 64 * 1024 * 1024    # <= physical VMEM on every generation (v7x: 64 MiB)
_SQRT_HALF = 0.7071067811865476
_SQRT_2_OVER_PI = 0.7978845608028654


def _round_up(x, m):
    return (x + m - 1) // m * m


def _erf(x):
    """erf via Abramowitz & Stegun 7.1.26 (max abs error 1.5e-7).

    Built only from mul/add/where/exp so it lowers on Mosaic regardless of
    whether a lax.erf rule exists; exp runs on the EUP (its own VLIW slot).
    """
    p = 0.3275911
    a1, a2, a3, a4, a5 = (0.254829592, -0.284496736, 1.421413741,
                          -1.453152027, 1.061405429)
    sgn = jnp.where(x < 0.0, -1.0, 1.0)
    ax = jnp.abs(x)
    t = 1.0 / (1.0 + p * ax)
    poly = ((((a5 * t + a4) * t + a3) * t + a2) * t + a1) * t
    return sgn * (1.0 - poly * jnp.exp(-(ax * ax)))


def _gelu(x, approximate):
    if approximate:
        # tanh form -> EUP, essentially free next to MXU/VPU work, but no longer
        # bit-matches PyTorch's erf GELU (~1e-3 level differences).
        inner = _SQRT_2_OVER_PI * (x + 0.044715 * x * x * x)
        return 0.5 * x * (1.0 + jnp.tanh(inner))
    return 0.5 * x * (1.0 + _erf(x * _SQRT_HALF))


# --------------------------------------------------------------------------- #
# Pass 1: per-batch GroupNorm statistics from patch-row statistics
# --------------------------------------------------------------------------- #
def _gn_stats_kernel(xp_ref, w_ref, gb_ref, ss_ref, s_ref, g_ref, *,
                     ck_pad, t_out, eps):
    """Accumulate s[k] = sum_j xp[k,j] and G[k,l] = sum_j xp[k,j]*xp[l,j].

    Exact f32 on the VPU (no MXU precision dependence), cost independent of
    C_out.  On the last time tile they are folded into per-channel scale/shift:
        mean_c = (w_c . s) / T_out
        var_c  = (w_c G w_c^T) / T_out - mean_c^2
        scale  = gamma * rsqrt(var + eps),   shift = beta - mean * scale
    Columns j >= T_out were zeroed in the wrapper, so no ragged masking here.
    """
    t = pl.program_id(1)

    @pl.when(t == 0)
    def _init():
        s_ref[...] = jnp.zeros_like(s_ref)
        g_ref[...] = jnp.zeros_like(g_ref)

    patch = xp_ref[...]                                         # (ck_pad, tts)
    s_ref[...] += jnp.sum(patch, axis=-1, keepdims=True)
    cols = []
    for k in range(ck_pad):                                     # ck_pad <= ~32
        cols.append(jnp.sum(patch * patch[k:k + 1, :], axis=-1, keepdims=True))
    g_ref[...] += jnp.concatenate(cols, axis=-1)                # (ck_pad, ck_pad)

    @pl.when(t == pl.num_programs(1) - 1)
    def _finalize():
        w = w_ref[...]                                          # (C_out, ck_pad)
        inv_n = 1.0 / t_out
        mean = jnp.zeros((w.shape[0], 1), jnp.float32)
        wg = jnp.zeros_like(w)
        for k in range(ck_pad):                                 # tiny, exact f32
            mean = mean + w[:, k:k + 1] * s_ref[k:k + 1, :]
            wg = wg + w[:, k:k + 1] * g_ref[k:k + 1, :]
        mean = mean * inv_n
        e2 = jnp.sum(wg * w, axis=-1, keepdims=True) * inv_n
        var = jnp.maximum(e2 - mean * mean, 0.0)                # guard tiny negatives
        gamma = gb_ref[:, 0:1]
        beta = gb_ref[:, 1:2]
        scale = gamma * jax.lax.rsqrt(var + eps)
        shift = beta - mean * scale
        ss_ref[...] = jnp.concatenate([scale, shift], axis=-1)  # (C_out, 2)


# --------------------------------------------------------------------------- #
# Pass 2: conv (one MXU matmul over the tap dim) + GN affine + GELU
# --------------------------------------------------------------------------- #
def _conv_gn_gelu_kernel(xp_ref, w_ref, ss_ref, o_ref, *, approximate_gelu):
    # Even at low MXU contraction utilization (CK ~ 16) the vmatmul sits in the
    # otherwise-idle vector-extended slot, leaving the VPU/EUP for GN + GELU.
    y = jnp.dot(w_ref[...], xp_ref[...],
                preferred_element_type=jnp.float32)             # (co_blk, tt)
    scale = ss_ref[:, 0:1]
    shift = ss_ref[:, 1:2]
    # Scale/shift applied to the dot result (one fused VPU mul-add per element)
    # rather than folded into the weights, so the MXU operands stay the raw
    # conv weights and accuracy does not depend on the MXU's f32 pass mode.
    z = y * scale + shift
    o_ref[...] = _gelu(z, approximate_gelu).astype(o_ref.dtype)


def hubert_groupnorm_conv_layer(x, conv_w, conv_b, gn_w, gn_b, *, stride,
                                t_tile=4096, stats_t_tile=8192,
                                approximate_gelu=False, out_dtype=None):
    """Fused Conv1d(stride, VALID) -> GroupNorm(groups=C_out) -> GELU.

    conv_b is accepted for API parity but unused: a per-channel constant is
    cancelled exactly by GroupNorm's per-channel mean subtraction.

    v5e/v6e (128 MiB VMEM) can raise t_tile to 8192 (and _VMEM_LIMIT); the 4096
    default stays well inside v7x's 64 MiB VMEM.
    """
    del conv_b
    B, C_in, T = x.shape
    C_out, c_in_w, K = conv_w.shape
    assert c_in_w == C_in
    assert stride >= 1
    T_out = (T - K) // stride + 1
    assert T_out >= 1, "input too short for this kernel/stride"
    out_dtype = x.dtype if out_dtype is None else out_dtype

    x = x.astype(jnp.float32)

    # Tap geometry: k = q*stride + r with r in [0, stride), q in [0, q_max).
    q_max = -(-K // stride)                   # ceil(K / stride)
    k_pad = q_max * stride                    # phase-padded taps per in-channel
    ck = C_in * k_pad
    ck_pad = _round_up(max(ck, 8), 8)         # sublane-friendly contraction dim
    # NOTE: the patch-row array grows the input by ~q_max x (2x for HuBERT's
    # layer-0 K=10/stride=5); stride == 1 would degenerate to a full im2col.

    # Lane-dense time tiles (multiples of 128).
    tt = min(_round_up(t_tile, 128), _round_up(T_out, 128))
    n_t = pl.cdiv(T_out, tt)
    tts = min(_round_up(stats_t_tile, 128), _round_up(T_out, 128))
    n_ts = pl.cdiv(T_out, tts)
    J = max(n_t * tt, n_ts * tts)             # columns both kernels may address

    # Patch rows: xp[b, ci*k_pad + q*stride + r, j] = x[b, ci, (j+q)*stride + r],
    # zero-padded past T and zeroed for j >= T_out, so every in-kernel access is
    # a 128-aligned full block and no kernel needs ragged-tail masking.
    T_need = (J + q_max) * stride
    x_pad = jnp.pad(x, ((0, 0), (0, 0), (0, T_need - T)))
    xr = x_pad.reshape(B, C_in, J + q_max, stride)     # xr[b,ci,m,r] = x[b,ci,m*stride+r]
    planes = [xr[:, :, q:q + J, :].transpose(0, 1, 3, 2) for q in range(q_max)]
    xp = jnp.stack(planes, axis=2).reshape(B, ck, J)   # taps in (ci, q, r) order
    xp = jnp.pad(xp, ((0, 0), (0, ck_pad - ck), (0, 0)))
    col = jax.lax.broadcasted_iota(jnp.int32, (1, 1, J), 2)
    xp = jnp.where(col < T_out, xp, 0.0)

    # Conv weights flattened in the same (ci, q, r) tap order; padded taps -> 0.
    w_k = jnp.pad(conv_w.astype(jnp.float32), ((0, 0), (0, 0), (0, k_pad - K)))
    w2 = jnp.pad(w_k.reshape(C_out, ck), ((0, 0), (0, ck_pad - ck)))
    gb = jnp.stack([gn_w, gn_b], axis=1).astype(jnp.float32)        # (C_out, 2)

    # ---- Pass 1: per-batch stats -> per-channel folded GN scale/shift ----
    ss = pl.pallas_call(
        functools.partial(_gn_stats_kernel, ck_pad=ck_pad, t_out=T_out, eps=EPS),
        out_shape=jax.ShapeDtypeStruct((B, C_out, 2), jnp.float32),
        grid=(B, n_ts),
        in_specs=[
            pl.BlockSpec((None, ck_pad, tts), lambda b, t: (b, 0, t)),
            pl.BlockSpec((C_out, ck_pad), lambda b, t: (0, 0)),
            pl.BlockSpec((C_out, 2), lambda b, t: (0, 0)),
        ],
        out_specs=pl.BlockSpec((None, C_out, 2), lambda b, t: (b, 0, 0)),
        scratch_shapes=[pltpu.VMEM((ck_pad, 1), jnp.float32),
                        pltpu.VMEM((ck_pad, ck_pad), jnp.float32)],
        compiler_params=pltpu.CompilerParams(
            dimension_semantics=("parallel", "arbitrary"),
            vmem_limit_bytes=_VMEM_LIMIT),
    )(xp, w2, gb)

    # ---- Pass 2: conv (MXU) + GN affine + GELU, lane-dense output tiles ----
    if C_out % 256 == 0:
        co_blk = 256
    elif C_out % 128 == 0:
        co_blk = 128
    else:
        # TODO(synk): pad C_out to a multiple of 128 (masked) so both v7x
        # TensorCores get work at B == 1 for non-128-divisible channel counts.
        co_blk = C_out
    n_co = C_out // co_blk

    conv_macs = B * C_out * T_out * C_in * K
    cost = pl.CostEstimate(
        flops=int(2 * conv_macs + 12 * B * C_out * T_out),
        transcendentals=int(B * C_out * T_out),
        bytes_accessed=int(4 * (xp.size + w2.size + ss.size)
                           + jnp.dtype(out_dtype).itemsize * B * C_out * T_out),
    )

    return pl.pallas_call(
        functools.partial(_conv_gn_gelu_kernel, approximate_gelu=approximate_gelu),
        out_shape=jax.ShapeDtypeStruct((B, C_out, T_out), out_dtype),
        grid=(B, n_co, n_t),
        in_specs=[
            pl.BlockSpec((None, ck_pad, tt), lambda b, co, t: (b, 0, t)),
            pl.BlockSpec((co_blk, ck_pad), lambda b, co, t: (co, 0)),
            pl.BlockSpec((None, co_blk, 2), lambda b, co, t: (b, co, 0)),
        ],
        out_specs=pl.BlockSpec((None, co_blk, tt), lambda b, co, t: (b, co, t)),
        compiler_params=pltpu.CompilerParams(
            dimension_semantics=("parallel", "parallel", "arbitrary"),
            vmem_limit_bytes=_VMEM_LIMIT),
        cost_estimate=cost,
    )(xp, w2, ss)


# --------------------------------------------------------------------------- #
# Reference + self-test
# --------------------------------------------------------------------------- #
def _reference(x, conv_w, conv_b, gn_w, gn_b, *, stride):
    """Pure-JAX reference mirroring the PyTorch module (bias included)."""
    y = jax.lax.conv_general_dilated(
        x.astype(jnp.float32), conv_w.astype(jnp.float32),
        window_strides=(stride,), padding="VALID",
        dimension_numbers=("NCH", "OIH", "NCH"),
        precision=jax.lax.Precision.HIGHEST)
    y = y + conv_b[None, :, None]
    mean = jnp.mean(y, axis=-1, keepdims=True)
    var = jnp.mean((y - mean) ** 2, axis=-1, keepdims=True)
    y = (y - mean) * jax.lax.rsqrt(var + EPS)
    y = gn_w[None, :, None] * y + gn_b[None, :, None]
    return jax.nn.gelu(y, approximate=False)


def _bf16_snap(a):
    # Snap test data to bf16-representable f32 values so the kernel's MXU dot
    # matches the f32 reference regardless of the MXU's f32 pass mode.
    return a.astype(jnp.bfloat16).astype(jnp.float32)


if __name__ == "__main__":
    def _run_case(B, C_in, T, C_out, K, stride, **kwargs):
        key = jax.random.PRNGKey(0)
        kx, kw_, kb, kg, kbe = jax.random.split(key, 5)
        x = _bf16_snap(jax.random.normal(kx, (B, C_in, T), jnp.float32))
        conv_w = _bf16_snap(0.1 * jax.random.normal(kw_, (C_out, C_in, K), jnp.float32))
        conv_b = _bf16_snap(0.1 * jax.random.normal(kb, (C_out,), jnp.float32))
        gn_w = _bf16_snap(1.0 + 0.1 * jax.random.normal(kg, (C_out,), jnp.float32))
        gn_b = _bf16_snap(0.1 * jax.random.normal(kbe, (C_out,), jnp.float32))

        out = hubert_groupnorm_conv_layer(x, conv_w, conv_b, gn_w, gn_b,
                                          stride=stride, **kwargs)
        out = jax.block_until_ready(out)
        ref = jax.block_until_ready(
            _reference(x, conv_w, conv_b, gn_w, gn_b, stride=stride))
        T_out = (T - K) // stride + 1
        assert out.shape == ref.shape == (B, C_out, T_out), (out.shape, ref.shape)
        np.testing.assert_allclose(np.asarray(out), np.asarray(ref),
                                   atol=1e-4, rtol=1e-4)

    # HuBERT layer-0 shape family (in_conv_dim = 1), small: single time tile.
    _run_case(B=2, C_in=1, T=64, C_out=32, K=10, stride=5)
    # Multi-tile path: 2 stats tiles + 2 apply tiles (ragged tail), 2 C_out blocks.
    _run_case(B=1, C_in=1, T=1200, C_out=512, K=10, stride=5,
              t_tile=128, stats_t_tile=128)
    # Generic C_in > 1 with phase-padded taps (q_max*stride > K).
    _run_case(B=2, C_in=3, T=47, C_out=16, K=4, stride=3)

    print("KERNEL_OK")
</pallas_src>

<mosaic_0001>
module attributes {stable_mosaic.version = 11 : i64} {
  func.func @_gn_stats_kernel(%arg0: i32, %arg1: i32, %arg2: memref<1x16x128xf32, #tpu.memory_space<vmem>>, %arg3: memref<32x16xf32, #tpu.memory_space<vmem>>, %arg4: memref<32x2xf32, #tpu.memory_space<vmem>>, %arg5: memref<1x32x2xf32, #tpu.memory_space<vmem>>, %arg6: memref<16x1xf32, #tpu.memory_space<vmem>>, %arg7: memref<16x16xf32, #tpu.memory_space<vmem>>) attributes {dimension_semantics = [#tpu.dimension_semantics<parallel>, #tpu.dimension_semantics<arbitrary>], iteration_bounds = array<i64: 2, 1>, scalar_prefetch = 0 : i64, scratch_operands = 2 : i64, tpu.core_type = #tpu.core_type<tc>, window_params = [{transform_indices = @transform_0, window_bounds = array<i64: 1, 16, 128>}, {pipeline_mode = #tpu.pipeline_mode<synchronous>, transform_indices = @transform_1, window_bounds = array<i64: 32, 16>}, {pipeline_mode = #tpu.pipeline_mode<synchronous>, transform_indices = @transform_2, window_bounds = array<i64: 32, 2>}, {transform_indices = @transform_3, window_bounds = array<i64: 1, 32, 2>}]} {
    %c0_i32 = arith.constant 0 : i32
    %0 = arith.cmpi eq, %arg1, %c0_i32 : i32
    %1 = arith.extui %0 : i1 to i32
    %c0_i32_0 = arith.constant 0 : i32
    %2 = arith.cmpi ne, %1, %c0_i32_0 : i32
    scf.if %2 {
      %cst_29 = arith.constant 0.000000e+00 : f32
      %97 = vector.broadcast %cst_29 : f32 to vector<16x1xf32>
      %c0_30 = arith.constant 0 : index
      %c0_31 = arith.constant 0 : index
      %98 = vector.load %arg6[%c0_30, %c0_31] : memref<16x1xf32, #tpu.memory_space<vmem>>, vector<16x1xf32>
      tpu.vector_store %arg6[%c0_30, %c0_31], %97 {strides = array<i32>} : memref<16x1xf32, #tpu.memory_space<vmem>>, vector<16x1xf32>,
      %cst_32 = arith.constant 0.000000e+00 : f32
      %99 = vector.broadcast %cst_32 : f32 to vector<16x16xf32>
      %c0_33 = arith.constant 0 : index
      %c0_34 = arith.constant 0 : index
      %100 = vector.load %arg7[%c0_33, %c0_34] : memref<16x16xf32, #tpu.memory_space<vmem>>, vector<16x16xf32>
      tpu.vector_store %arg7[%c0_33, %c0_34], %99 {strides = array<i32>} : memref<16x16xf32, #tpu.memory_space<vmem>>, vector<16x16xf32>,
    } else {
    }
    %c0 = arith.constant 0 : index
    %c0_1 = arith.constant 0 : index
    %c0_2 = arith.constant 0 : index
    %3 = vector.load %arg2[%c0, %c0_1, %c0_2] : memref<1x16x128xf32, #tpu.memory_space<vmem>>, vector<1x16x128xf32>
    %4 = vector.shape_cast %3 : vector<1x16x128xf32> to vector<16x128xf32>
    %c0_3 = arith.constant 0 : index
    %c0_4 = arith.constant 0 : index
    %5 = vector.load %arg6[%c0_3, %c0_4] : memref<16x1xf32, #tpu.memory_space<vmem>>, vector<16x1xf32>
    %cst = arith.constant dense<0.000000e+00> : vector<16xf32>
    %6 = vector.multi_reduction <add>, %4, %cst [1] : vector<16x128xf32> to vector<16xf32>
    %7 = vector.shape_cast %6 : vector<16xf32> to vector<16x1xf32>
    %8 = arith.addf %5, %7 : vector<16x1xf32>
    %c0_5 = arith.constant 0 : index
    %c0_6 = arith.constant 0 : index
    %9 = vector.load %arg6[%c0_5, %c0_6] : memref<16x1xf32, #tpu.memory_space<vmem>>, vector<16x1xf32>
    tpu.vector_store %arg6[%c0_5, %c0_6], %8 {strides = array<i32>} : memref<16x1xf32, #tpu.memory_space<vmem>>, vector<16x1xf32>,
    %10 = vector.extract_strided_slice %4 {offsets = [0, 0], sizes = [1, 128], strides = [1, 1]} : vector<16x128xf32> to vector<1x128xf32>
    %11 = vector.broadcast %10 : vector<1x128xf32> to vector<16x128xf32>
    %12 = arith.mulf %4, %11 : vector<16x128xf32>
    %cst_7 = arith.constant dense<0.000000e+00> : vector<16xf32>
    %13 = vector.multi_reduction <add>, %12, %cst_7 [1] : vector<16x128xf32> to vector<16xf32>
    %14 = vector.shape_cast %13 : vector<16xf32> to vector<16x1xf32>
    %15 = vector.extract_strided_slice %4 {offsets = [1, 0], sizes = [1, 128], strides = [1, 1]} : vector<16x128xf32> to vector<1x128xf32>
    %16 = vector.broadcast %15 : vector<1x128xf32> to vector<16x128xf32>
    %17 = arith.mulf %4, %16 : vector<16x128xf32>
    %cst_8 = arith.constant dense<0.000000e+00> : vector<16xf32>
    %18 = vector.multi_reduction <add>, %17, %cst_8 [1] : vector<16x128xf32> to vector<16xf32>
    %19 = vector.shape_cast %18 : vector<16xf32> to vector<16x1xf32>
    %20 = vector.extract_strided_slice %4 {offsets = [2, 0], sizes = [1, 128], strides = [1, 1]} : vector<16x128xf32> to vector<1x128xf32>
    %21 = vector.broadcast %20 : vector<1x128xf32> to vector<16x128xf32>
    %22 = arith.mulf %4, %21 : vector<16x128xf32>
    %cst_9 = arith.constant dense<0.000000e+00> : vector<16xf32>
    %23 = vector.multi_reduction <add>, %22, %cst_9 [1] : vector<16x128xf32> to vector<16xf32>
    %24 = vector.shape_cast %23 : vector<16xf32> to vector<16x1xf32>
    %25 = vector.extract_strided_slice %4 {offsets = [3, 0], sizes = [1, 128], strides = [1, 1]} : vector<16x128xf32> to vector<1x128xf32>
    %26 = vector.broadcast %25 : vector<1x128xf32> to vector<16x128xf32>
    %27 = arith.mulf %4, %26 : vector<16x128xf32>
    %cst_10 = arith.constant dense<0.000000e+00> : vector<16xf32>
    %28 = vector.multi_reduction <add>, %27, %cst_10 [1] : vector<16x128xf32> to vector<16xf32>
    %29 = vector.shape_cast %28 : vector<16xf32> to vector<16x1xf32>
    %30 = vector.extract_strided_slice %4 {offsets = [4, 0], sizes = [1, 128], strides = [1, 1]} : vector<16x128xf32> to vector<1x128xf32>
    %31 = vector.broadcast %30 : vector<1x128xf32> to vector<16x128xf32>
    %32 = arith.mulf %4, %31 : vector<16x128xf32>
    %cst_11 = arith.constant dense<0.000000e+00> : vector<16xf32>
    %33 = vector.multi_reduction <add>, %32, %cst_11 [1] : vector<16x128xf32> to vector<16xf32>
    %34 = vector.shape_cast %33 : vector<16xf32> to vector<16x1xf32>
    %35 = vector.extract_strided_slice %4 {offsets = [5, 0], sizes = [1, 128], strides = [1, 1]} : vector<16x128xf32> to vector<1x128xf32>
    %36 = vector.broadcast %35 : vector<1x128xf32> to vector<16x128xf32>
    %37 = arith.mulf %4, %36 : vector<16x128xf32>
    %cst_12 = arith.constant dense<0.000000e+00> : vector<16xf32>
    %38 = vector.multi_reduction <add>, %37, %cst_12 [1] : vector<16x128xf32> to vector<16xf32>
    %39 = vector.shape_cast %38 : vector<16xf32> to vector<16x1xf32>
    %40 = vector.extract_strided_slice %4 {offsets = [6, 0], sizes = [1, 128], strides = [1, 1]} : vector<16x128xf32> to vector<1x128xf32>
    %41 = vector.broadcast %40 : vector<1x128xf32> to vector<16x128xf32>
    %42 = arith.mulf %4, %41 : vector<16x128xf32>
    %cst_13 = arith.constant dense<0.000000e+00> : vector<16xf32>
    %43 = vector.multi_reduction <add>, %42, %cst_13 [1] : vector<16x128xf32> to vector<16xf32>
    %44 = vector.shape_cast %43 : vector<16xf32> to vector<16x1xf32>
    %45 = vector.extract_strided_slice %4 {offsets = [7, 0], sizes = [1, 128], strides = [1, 1]} : vector<16x128xf32> to vector<1x128xf32>
    %46 = vector.broadcast %45 : vector<1x128xf32> to vector<16x128xf32>
    %47 = arith.mulf %4, %46 : vector<16x128xf32>
    %cst_14 = arith.constant dense<0.000000e+00> : vector<16xf32>
    %48 = vector.multi_reduction <add>, %47, %cst_14 [1] : vector<16x128xf32> to vector<16xf32>
    %49 = vector.shape_cast %48 : vector<16xf32> to vector<16x1xf32>
    %50 = vector.extract_strided_slice %4 {offsets = [8, 0], sizes = [1, 128], strides = [1, 1]} : vector<16x128xf32> to vector<1x128xf32>
    %51 = vector.broadcast %50 : vector<1x128xf32> to vector<16x128xf32>
    %52 = arith.mulf %4, %51 : vector<16x128xf32>
    %cst_15 = arith.constant dense<0.000000e+00> : vector<16xf32>
    %53 = vector.multi_reduction <add>, %52, %cst_15 [1] : vector<16x128xf32> to vector<16xf32>
    %54 = vector.shape_cast %53 : vector<16xf32> to vector<16x1xf32>
    %55 = vector.extract_strided_slice %4 {offsets = [9, 0], sizes = [1, 128], strides = [1, 1]} : vector<16x128xf32> to vector<1x128xf32>
    %56 = vector.broadcast %55 : vector<1x128xf32> to vector<16x128xf32>
    %57 = arith.mulf %4, %56 : vector<16x128xf32>
    %cst_16 = arith.constant dense<0.000000e+00> : vector<16xf32>
    %58 = vector.multi_reduction <add>, %57, %cst_16 [1] : vector<16x128xf32> to vector<16xf32>
    %59 = vector.shape_cast %58 : vector<16xf32> to vector<16x1xf32>
    %60 = vector.extract_strided_slice %4 {offsets = [10, 0], sizes = [1, 128], strides = [1, 1]} : vector<16x128xf32> to vector<1x128xf32>
    %61 = vector.broadcast %60 : vector<1x128xf32> to vector<16x128xf32>
    %62 = arith.mulf %4, %61 : vector<16x128xf32>
    %cst_17 = arith.constant dense<0.000000e+00> : vector<16xf32>
    %63 = vector.multi_reduction <add>, %62, %cst_17 [1] : vector<16x128xf32> to vector<16xf32>
    %64 = vector.shape_cast %63 : vector<16xf32> to vector<16x1xf32>
    %65 = vector.extract_strided_slice %4 {offsets = [11, 0], sizes = [1, 128], strides = [1, 1]} : vector<16x128xf32> to vector<1x128xf32>
    %66 = vector.broadcast %65 : vector<1x128xf32> to vector<16x128xf32>
    %67 = arith.mulf %4, %66 : vector<16x128xf32>
    %cst_18 = arith.constant dense<0.000000e+00> : vector<16xf32>
    %68 = vector.multi_reduction <add>, %67, %cst_18 [1] : vector<16x128xf32> to vector<16xf32>
    %69 = vector.shape_cast %68 : vector<16xf32> to vector<16x1xf32>
    %70 = vector.extract_strided_slice %4 {offsets = [12, 0], sizes = [1, 128], strides = [1, 1]} : vector<16x128xf32> to vector<1x128xf32>
    %71 = vector.broadcast %70 : vector<1x128xf32> to vector<16x128xf32>
    %72 = arith.mulf %4, %71 : vector<16x128xf32>
    %cst_19 = arith.constant dense<0.000000e+00> : vector<16xf32>
    %73 = vector.multi_reduction <add>, %72, %cst_19 [1] : vector<16x128xf32> to vector<16xf32>
    %74 = vector.shape_cast %73 : vector<16xf32> to vector<16x1xf32>
    %75 = vector.extract_strided_slice %4 {offsets = [13, 0], sizes = [1, 128], strides = [1, 1]} : vector<16x128xf32> to vector<1x128xf32>
    %76 = vector.broadcast %75 : vector<1x128xf32> to vector<16x128xf32>
    %77 = arith.mulf %4, %76 : vector<16x128xf32>
    %cst_20 = arith.constant dense<0.000000e+00> : vector<16xf32>
    %78 = vector.multi_reduction <add>, %77, %cst_20 [1] : vector<16x128xf32> to vector<16xf32>
    %79 = vector.shape_cast %78 : vector<16xf32> to vector<16x1xf32>
    %80 = vector.extract_strided_slice %4 {offsets = [14, 0], sizes = [1, 128], strides = [1, 1]} : vector<16x128xf32> to vector<1x128xf32>
    %81 = vector.broadcast %80 : vector<1x128xf32> to vector<16x128xf32>
    %82 = arith.mulf %4, %81 : vector<16x128xf32>
    %cst_21 = arith.constant dense<0.000000e+00> : vector<16xf32>
    %83 = vector.multi_reduction <add>, %82, %cst_21 [1] : vector<16x128xf32> to vector<16xf32>
    %84 = vector.shape_cast %83 : vector<16xf32> to vector<16x1xf32>
    %85 = vector.extract_strided_slice %4 {offsets = [15, 0], sizes = [1, 128], strides = [1, 1]} : vector<16x128xf32> to vector<1x128xf32>
    %86 = vector.broadcast %85 : vector<1x128xf32> to vector<16x128xf32>
    %87 = arith.mulf %4, %86 : vector<16x128xf32>
    %cst_22 = arith.constant dense<0.000000e+00> : vector<16xf32>
    %88 = vector.multi_reduction <add>, %87, %cst_22 [1] : vector<16x128xf32> to vector<16xf32>
    %89 = vector.shape_cast %88 : vector<16xf32> to vector<16x1xf32>
    %c0_23 = arith.constant 0 : index
    %c0_24 = arith.constant 0 : index
    %90 = vector.load %arg7[%c0_23, %c0_24] : memref<16x16xf32, #tpu.memory_space<vmem>>, vector<16x16xf32>
    %91 = tpu.concatenate %14, %19, %24, %29, %34, %39, %44, %49, %54, %59, %64, %69, %74, %79, %84, %89 in 1 : vector<16x1xf32>, vector<16x1xf32>, vector<16x1xf32>, vector<16x1xf32>, vector<16x1xf32>, vector<16x1xf32>, vector<16x1xf32>, vector<16x1xf32>, vector<16x1xf32>, vector<16x1xf32>, vector<16x1xf32>, vector<16x1xf32>, vector<16x1xf32>, vector<16x1xf32>, vector<16x1xf32>, vector<16x1xf32> -> vector<16x16xf32>
    %92 = arith.addf %90, %91 : vector<16x16xf32>
    %c0_25 = arith.constant 0 : index
    %c0_26 = arith.constant 0 : index
    %93 = vector.load %arg7[%c0_25, %c0_26] : memref<16x16xf32, #tpu.memory_space<vmem>>, vector<16x16xf32>
    tpu.vector_store %arg7[%c0_25, %c0_26], %92 {strides = array<i32>} : memref<16x16xf32, #tpu.memory_space<vmem>>, vector<16x16xf32>,
    %c0_i32_27 = arith.constant 0 : i32
    %94 = arith.cmpi eq, %arg1, %c0_i32_27 : i32
    %95 = arith.extui %94 : i1 to i32
    %c0_i32_28 = arith.constant 0 : i32
    %96 = arith.cmpi ne, %95, %c0_i32_28 : i32
    scf.if %96 {
      %c0_29 = arith.constant 0 : index
      %c0_30 = arith.constant 0 : index
      %97 = vector.load %arg3[%c0_29, %c0_30] : memref<32x16xf32, #tpu.memory_space<vmem>>, vector<32x16xf32>
      %cst_31 = arith.constant 0.000000e+00 : f32
      %98 = vector.broadcast %cst_31 : f32 to vector<32x1xf32>
      %cst_32 = arith.constant 0.000000e+00 : f32
      %99 = vector.broadcast %cst_32 : f32 to vector<32x16xf32>
      %100 = vector.extract_strided_slice %97 {offsets = [0, 0], sizes = [32, 1], strides = [1, 1]} : vector<32x16xf32> to vector<32x1xf32>
      %c0_33 = arith.constant 0 : index
      %c0_34 = arith.constant 0 : index
      %101 = vector.load %arg6[%c0_33, %c0_34] : memref<16x1xf32, #tpu.memory_space<vmem>>, vector<1x1xf32>
      %102 = vector.broadcast %101 : vector<1x1xf32> to vector<32x1xf32>
      %103 = arith.mulf %100, %102 : vector<32x1xf32>
      %104 = arith.addf %98, %103 : vector<32x1xf32>
      %105 = vector.extract_strided_slice %97 {offsets = [0, 0], sizes = [32, 1], strides = [1, 1]} : vector<32x16xf32> to vector<32x1xf32>
      %c0_35 = arith.constant 0 : index
      %c0_36 = arith.constant 0 : index
      %106 = vector.load %arg7[%c0_35, %c0_36] : memref<16x16xf32, #tpu.memory_space<vmem>>, vector<1x16xf32>
      %107 = vector.broadcast %105 : vector<32x1xf32> to vector<32x16xf32>
      %108 = vector.broadcast %106 : vector<1x16xf32> to vector<32x16xf32>
      %109 = arith.mulf %107, %108 : vector<32x16xf32>
      %110 = arith.addf %99, %109 : vector<32x16xf32>
      %111 = vector.extract_strided_slice %97 {offsets = [0, 1], sizes = [32, 1], strides = [1, 1]} : vector<32x16xf32> to vector<32x1xf32>
      %c1 = arith.constant 1 : index
      %c0_37 = arith.constant 0 : index
      %112 = vector.load %arg6[%c1, %c0_37] : memref<16x1xf32, #tpu.memory_space<vmem>>, vector<1x1xf32>
      %113 = vector.broadcast %112 : vector<1x1xf32> to vector<32x1xf32>
      %114 = arith.mulf %111, %113 : vector<32x1xf32>
      %115 = arith.addf %104, %114 : vector<32x1xf32>
      %116 = vector.extract_strided_slice %97 {offsets = [0, 1], sizes = [32, 1], strides = [1, 1]} : vector<32x16xf32> to vector<32x1xf32>
      %c1_38 = arith.constant 1 : index
      %c0_39 = arith.constant 0 : index
      %117 = vector.load %arg7[%c1_38, %c0_39] : memref<16x16xf32, #tpu.memory_space<vmem>>, vector<1x16xf32>
      %118 = vector.broadcast %116 : vector<32x1xf32> to vector<32x16xf32>
      %119 = vector.broadcast %117 : vector<1x16xf32> to vector<32x16xf32>
      %120 = arith.mulf %118, %119 : vector<32x16xf32>
      %121 = arith.addf %110, %120 : vector<32x16xf32>
      %122 = vector.extract_strided_slice %97 {offsets = [0, 2], sizes = [32, 1], strides = [1, 1]} : vector<32x16xf32> to vector<32x1xf32>
      %c2 = arith.constant 2 : index
      %c0_40 = arith.constant 0 : index
      %123 = vector.load %arg6[%c2, %c0_40] : memref<16x1xf32, #tpu.memory_space<vmem>>, vector<1x1xf32>
      %124 = vector.broadcast %123 : vector<1x1xf32> to vector<32x1xf32>
      %125 = arith.mulf %122, %124 : vector<32x1xf32>
      %126 = arith.addf %115, %125 : vector<32x1xf32>
      %127 = vector.extract_strided_slice %97 {offsets = [0, 2], sizes = [32, 1], strides = [1, 1]} : vector<32x16xf32> to vector<32x1xf32>
      %c2_41 = arith.constant 2 : index
      %c0_42 = arith.constant 0 : index
      %128 = vector.load %arg7[%c2_41, %c0_42] : memref<16x16xf32, #tpu.memory_space<vmem>>, vector<1x16xf32>
      %129 = vector.broadcast %127 : vector<32x1xf32> to vector<32x16xf32>
      %130 = vector.broadcast %128 : vector<1x16xf32> to vector<32x16xf32>
      %131 = arith.mulf %129, %130 : vector<32x16xf32>
      %132 = arith.addf %121, %131 : vector<32x16xf32>
      %133 = vector.extract_strided_slice %97 {offsets = [0, 3], sizes = [32, 1], strides = [1, 1]} : vector<32x16xf32> to vector<32x1xf32>
      %c3 = arith.constant 3 : index
      %c0_43 = arith.constant 0 : index
      %134 = vector.load %arg6[%c3, %c0_43] : memref<16x1xf32, #tpu.memory_space<vmem>>, vector<1x1xf32>
      %135 = vector.broadcast %134 : vector<1x1xf32> to vector<32x1xf32>
      %136 = arith.mulf %133, %135 : vector<32x1xf32>
      %137 = arith.addf %126, %136 : vector<32x1xf32>
      %138 = vector.extract_strided_slice %97 {offsets = [0, 3], sizes = [32, 1], strides = [1, 1]} : vector<32x16xf32> to vector<32x1xf32>
      %c3_44 = arith.constant 3 : index
      %c0_45 = arith.constant 0 : index
      %139 = vector.load %arg7[%c3_44, %c0_45] : memref<16x16xf32, #tpu.memory_space<vmem>>, vector<1x16xf32>
      %140 = vector.broadcast %138 : vector<32x1xf32> to vector<32x16xf32>
      %141 = vector.broadcast %139 : vector<1x16xf32> to vector<32x16xf32>
      %142 = arith.mulf %140, %141 : vector<32x16xf32>
      %143 = arith.addf %132, %142 : vector<32x16xf32>
      %144 = vector.extract_strided_slice %97 {offsets = [0, 4], sizes = [32, 1], strides = [1, 1]} : vector<32x16xf32> to vector<32x1xf32>
      %c4 = arith.constant 4 : index
      %c0_46 = arith.constant 0 : index
      %145 = vector.load %arg6[%c4, %c0_46] : memref<16x1xf32, #tpu.memory_space<vmem>>, vector<1x1xf32>
      %146 = vector.broadcast %145 : vector<1x1xf32> to vector<32x1xf32>
      %147 = arith.mulf %144, %146 : vector<32x1xf32>
      %148 = arith.addf %137, %147 : vector<32x1xf32>
      %149 = vector.extract_strided_slice %97 {offsets = [0, 4], sizes = [32, 1], strides = [1, 1]} : vector<32x16xf32> to vector<32x1xf32>
      %c4_47 = arith.constant 4 : index
      %c0_48 = arith.constant 0 : index
      %150 = vector.load %arg7[%c4_47, %c0_48] : memref<16x16xf32, #tpu.memory_space<vmem>>, vector<1x16xf32>
      %151 = vector.broadcast %149 : vector<32x1xf32> to vector<32x16xf32>
      %152 = vector.broadcast %150 : vector<1x16xf32> to vector<32x16xf32>
      %153 = arith.mulf %151, %152 : vector<32x16xf32>
      %154 = arith.addf %143, %153 : vector<32x16xf32>
      %155 = vector.extract_strided_slice %97 {offsets = [0, 5], sizes = [32, 1], strides = [1, 1]} : vector<32x16xf32> to vector<32x1xf32>
      %c5 = arith.constant 5 : index
      %c0_49 = arith.constant 0 : index
      %156 = vector.load %arg6[%c5, %c0_49] : memref<16x1xf32, #tpu.memory_space<vmem>>, vector<1x1xf32>
      %157 = vector.broadcast %156 : vector<1x1xf32> to vector<32x1xf32>
      %158 = arith.mulf %155, %157 : vector<32x1xf32>
      %159 = arith.addf %148, %158 : vector<32x1xf32>
      %160 = vector.extract_strided_slice %97 {offsets = [0, 5], sizes = [32, 1], strides = [1, 1]} : vector<32x16xf32> to vector<32x1xf32>
      %c5_50 = arith.constant 5 : index
      %c0_51 = arith.constant 0 : index
      %161 = vector.load %arg7[%c5_50, %c0_51] : memref<16x16xf32, #tpu.memory_space<vmem>>, vector<1x16xf32>
      %162 = vector.broadcast %160 : vector<32x1xf32> to vector<32x16xf32>
      %163 = vector.broadcast %161 : vector<1x16xf32> to vector<32x16xf32>
      %164 = arith.mulf %162, %163 : vector<32x16xf32>
      %165 = arith.addf %154, %164 : vector<32x16xf32>
      %166 = vector.extract_strided_slice %97 {offsets = [0, 6], sizes = [32, 1], strides = [1, 1]} : vector<32x16xf32> to vector<32x1xf32>
      %c6 = arith.constant 6 : index
      %c0_52 = arith.constant 0 : index
      %167 = vector.load %arg6[%c6, %c0_52] : memref<16x1xf32, #tpu.memory_space<vmem>>, vector<1x1xf32>
      %168 = vector.broadcast %167 : vector<1x1xf32> to vector<32x1xf32>
      %169 = arith.mulf %166, %168 : vector<32x1xf32>
      %170 = arith.addf %159, %169 : vector<32x1xf32>
      %171 = vector.extract_strided_slice %97 {offsets = [0, 6], sizes = [32, 1], strides = [1, 1]} : vector<32x16xf32> to vector<32x1xf32>
      %c6_53 = arith.constant 6 : index
      %c0_54 = arith.constant 0 : index
      %172 = vector.load %arg7[%c6_53, %c0_54] : memref<16x16xf32, #tpu.memory_space<vmem>>, vector<1x16xf32>
      %173 = vector.broadcast %171 : vector<32x1xf32> to vector<32x16xf32>
      %174 = vector.broadcast %172 : vector<1x16xf32> to vector<32x16xf32>
      %175 = arith.mulf %173, %174 : vector<32x16xf32>
      %176 = arith.addf %165, %175 : vector<32x16xf32>
      %177 = vector.extract_strided_slice %97 {offsets = [0, 7], sizes = [32, 1], strides = [1, 1]} : vector<32x16xf32> to vector<32x1xf32>
      %c7 = arith.constant 7 : index
      %c0_55 = arith.constant 0 : index
      %178 = vector.load %arg6[%c7, %c0_55] : memref<16x1xf32, #tpu.memory_space<vmem>>, vector<1x1xf32>
      %179 = vector.broadcast %178 : vector<1x1xf32> to vector<32x1xf32>
      %180 = arith.mulf %177, %179 : vector<32x1xf32>
      %181 = arith.addf %170, %180 : vector<32x1xf32>
      %182 = vector.extract_strided_slice %97 {offsets = [0, 7], sizes = [32, 1], strides = [1, 1]} : vector<32x16xf32> to vector<32x1xf32>
      %c7_56 = arith.constant 7 : index
      %c0_57 = arith.constant 0 : index
      %183 = vector.load %arg7[%c7_56, %c0_57] : memref<16x16xf32, #tpu.memory_space<vmem>>, vector<1x16xf32>
      %184 = vector.broadcast %182 : vector<32x1xf32> to vector<32x16xf32>
      %185 = vector.broadcast %183 : vector<1x16xf32> to vector<32x16xf32>
      %186 = arith.mulf %184, %185 : vector<32x16xf32>
      %187 = arith.addf %176, %186 : vector<32x16xf32>
      %188 = vector.extract_strided_slice %97 {offsets = [0, 8], sizes = [32, 1], strides = [1, 1]} : vector<32x16xf32> to vector<32x1xf32>
      %c8 = arith.constant 8 : index
      %c0_58 = arith.constant 0 : index
      %189 = vector.load %arg6[%c8, %c0_58] : memref<16x1xf32, #tpu.memory_space<vmem>>, vector<1x1xf32>
      %190 = vector.broadcast %189 : vector<1x1xf32> to vector<32x1xf32>
      %191 = arith.mulf %188, %190 : vector<32x1xf32>
      %192 = arith.addf %181, %191 : vector<32x1xf32>
      %193 = vector.extract_strided_slice %97 {offsets = [0, 8], sizes = [32, 1], strides = [1, 1]} : vector<32x16xf32> to vector<32x1xf32>
      %c8_59 = arith.constant 8 : index
      %c0_60 = arith.constant 0 : index
      %194 = vector.load %arg7[%c8_59, %c0_60] : memref<16x16xf32, #tpu.memory_space<vmem>>, vector<1x16xf32>
      %195 = vector.broadcast %193 : vector<32x1xf32> to vector<32x16xf32>
      %196 = vector.broadcast %194 : vector<1x16xf32> to vector<32x16xf32>
      %197 = arith.mulf %195, %196 : vector<32x16xf32>
      %198 = arith.addf %187, %197 : vector<32x16xf32>
      %199 = vector.extract_strided_slice %97 {offsets = [0, 9], sizes = [32, 1], strides = [1, 1]} : vector<32x16xf32> to vector<32x1xf32>
      %c9 = arith.constant 9 : index
      %c0_61 = arith.constant 0 : index
      %200 = vector.load %arg6[%c9, %c0_61] : memref<16x1xf32, #tpu.memory_space<vmem>>, vector<1x1xf32>
      %201 = vector.broadcast %200 : vector<1x1xf32> to vector<32x1xf32>
      %202 = arith.mulf %199, %201 : vector<32x1xf32>
      %203 = arith.addf %192, %202 : vector<32x1xf32>
      %204 = vector.extract_strided_slice %97 {offsets = [0, 9], sizes = [32, 1], strides = [1, 1]} : vector<32x16xf32> to vector<32x1xf32>
      %c9_62 = arith.constant 9 : index
      %c0_63 = arith.constant 0 : index
      %205 = vector.load %arg7[%c9_62, %c0_63] : memref<16x16xf32, #tpu.memory_space<vmem>>, vector<1x16xf32>
      %206 = vector.broadcast %204 : vector<32x1xf32> to vector<32x16xf32>
      %207 = vector.broadcast %205 : vector<1x16xf32> to vector<32x16xf32>
      %208 = arith.mulf %206, %207 : vector<32x16xf32>
      %209 = arith.addf %198, %208 : vector<32x16xf32>
      %210 = vector.extract_strided_slice %97 {offsets = [0, 10], sizes = [32, 1], strides = [1, 1]} : vector<32x16xf32> to vector<32x1xf32>
      %c10 = arith.constant 10 : index
      %c0_64 = arith.constant 0 : index
      %211 = vector.load %arg6[%c10, %c0_64] : memref<16x1xf32, #tpu.memory_space<vmem>>, vector<1x1xf32>
      %212 = vector.broadcast %211 : vector<1x1xf32> to vector<32x1xf32>
      %213 = arith.mulf %210, %212 : vector<32x1xf32>
      %214 = arith.addf %203, %213 : vector<32x1xf32>
      %215 = vector.extract_strided_slice %97 {offsets = [0, 10], sizes = [32, 1], strides = [1, 1]} : vector<32x16xf32> to vector<32x1xf32>
      %c10_65 = arith.constant 10 : index
      %c0_66 = arith.constant 0 : index
      %216 = vector.load %arg7[%c10_65, %c0_66] : memref<16x16xf32, #tpu.memory_space<vmem>>, vector<1x16xf32>
      %217 = vector.broadcast %215 : vector<32x1xf32> to vector<32x16xf32>
      %218 = vector.broadcast %216 : vector<1x16xf32> to vector<32x16xf32>
      %219 = arith.mulf %217, %218 : vector<32x16xf32>
      %220 = arith.addf %209, %219 : vector<32x16xf32>
      %221 = vector.extract_strided_slice %97 {offsets = [0, 11], sizes = [32, 1], strides = [1, 1]} : vector<32x16xf32> to vector<32x1xf32>
      %c11 = arith.constant 11 : index
      %c0_67 = arith.constant 0 : index
      %222 = vector.load %arg6[%c11, %c0_67] : memref<16x1xf32, #tpu.memory_space<vmem>>, vector<1x1xf32>
      %223 = vector.broadcast %222 : vector<1x1xf32> to vector<32x1xf32>
      %224 = arith.mulf %221, %223 : vector<32x1xf32>
      %225 = arith.addf %214, %224 : vector<32x1xf32>
      %226 = vector.extract_strided_slice %97 {offsets = [0, 11], sizes = [32, 1], strides = [1, 1]} : vector<32x16xf32> to vector<32x1xf32>
      %c11_68 = arith.constant 11 : index
      %c0_69 = arith.constant 0 : index
      %227 = vector.load %arg7[%c11_68, %c0_69] : memref<16x16xf32, #tpu.memory_space<vmem>>, vector<1x16xf32>
      %228 = vector.broadcast %226 : vector<32x1xf32> to vector<32x16xf32>
      %229 = vector.broadcast %227 : vector<1x16xf32> to vector<32x16xf32>
      %230 = arith.mulf %228, %229 : vector<32x16xf32>
      %231 = arith.addf %220, %230 : vector<32x16xf32>
      %232 = vector.extract_strided_slice %97 {offsets = [0, 12], sizes = [32, 1], strides = [1, 1]} : vector<32x16xf32> to vector<32x1xf32>
      %c12 = arith.constant 12 : index
      %c0_70 = arith.constant 0 : index
      %233 = vector.load %arg6[%c12, %c0_70] : memref<16x1xf32, #tpu.memory_space<vmem>>, vector<1x1xf32>
      %234 = vector.broadcast %233 : vector<1x1xf32> to vector<32x1xf32>
      %235 = arith.mulf %232, %234 : vector<32x1xf32>
      %236 = arith.addf %225, %235 : vector<32x1xf32>
      %237 = vector.extract_strided_slice %97 {offsets = [0, 12], sizes = [32, 1], strides = [1, 1]} : vector<32x16xf32> to vector<32x1xf32>
      %c12_71 = arith.constant 12 : index
      %c0_72 = arith.constant 0 : index
      %238 = vector.load %arg7[%c12_71, %c0_72] : memref<16x16xf32, #tpu.memory_space<vmem>>, vector<1x16xf32>
      %239 = vector.broadcast %237 : vector<32x1xf32> to vector<32x16xf32>
      %240 = vector.broadcast %238 : vector<1x16xf32> to vector<32x16xf32>
      %241 = arith.mulf %239, %240 : vector<32x16xf32>
      %242 = arith.addf %231, %241 : vector<32x16xf32>
      %243 = vector.extract_strided_slice %97 {offsets = [0, 13], sizes = [32, 1], strides = [1, 1]} : vector<32x16xf32> to vector<32x1xf32>
      %c13 = arith.constant 13 : index
      %c0_73 = arith.constant 0 : index
      %244 = vector.load %arg6[%c13, %c0_73] : memref<16x1xf32, #tpu.memory_space<vmem>>, vector<1x1xf32>
      %245 = vector.broadcast %244 : vector<1x1xf32> to vector<32x1xf32>
      %246 = arith.mulf %243, %245 : vector<32x1xf32>
      %247 = arith.addf %236, %246 : vector<32x1xf32>
      %248 = vector.extract_strided_slice %97 {offsets = [0, 13], sizes = [32, 1], strides = [1, 1]} : vector<32x16xf32> to vector<32x1xf32>
      %c13_74 = arith.constant 13 : index
      %c0_75 = arith.constant 0 : index
      %249 = vector.load %arg7[%c13_74, %c0_75] : memref<16x16xf32, #tpu.memory_space<vmem>>, vector<1x16xf32>
      %250 = vector.broadcast %248 : vector<32x1xf32> to vector<32x16xf32>
      %251 = vector.broadcast %249 : vector<1x16xf32> to vector<32x16xf32>
      %252 = arith.mulf %250, %251 : vector<32x16xf32>
      %253 = arith.addf %242, %252 : vector<32x16xf32>
      %254 = vector.extract_strided_slice %97 {offsets = [0, 14], sizes = [32, 1], strides = [1, 1]} : vector<32x16xf32> to vector<32x1xf32>
      %c14 = arith.constant 14 : index
      %c0_76 = arith.constant 0 : index
      %255 = vector.load %arg6[%c14, %c0_76] : memref<16x1xf32, #tpu.memory_space<vmem>>, vector<1x1xf32>
      %256 = vector.broadcast %255 : vector<1x1xf32> to vector<32x1xf32>
      %257 = arith.mulf %254, %256 : vector<32x1xf32>
      %258 = arith.addf %247, %257 : vector<32x1xf32>
      %259 = vector.extract_strided_slice %97 {offsets = [0, 14], sizes = [32, 1], strides = [1, 1]} : vector<32x16xf32> to vector<32x1xf32>
      %c14_77 = arith.constant 14 : index
      %c0_78 = arith.constant 0 : index
      %260 = vector.load %arg7[%c14_77, %c0_78] : memref<16x16xf32, #tpu.memory_space<vmem>>, vector<1x16xf32>
      %261 = vector.broadcast %259 : vector<32x1xf32> to vector<32x16xf32>
      %262 = vector.broadcast %260 : vector<1x16xf32> to vector<32x16xf32>
      %263 = arith.mulf %261, %262 : vector<32x16xf32>
      %264 = arith.addf %253, %263 : vector<32x16xf32>
      %265 = vector.extract_strided_slice %97 {offsets = [0, 15], sizes = [32, 1], strides = [1, 1]} : vector<32x16xf32> to vector<32x1xf32>
      %c15 = arith.constant 15 : index
      %c0_79 = arith.constant 0 : index
      %266 = vector.load %arg6[%c15, %c0_79] : memref<16x1xf32, #tpu.memory_space<vmem>>, vector<1x1xf32>
      %267 = vector.broadcast %266 : vector<1x1xf32> to vector<32x1xf32>
      %268 = arith.mulf %265, %267 : vector<32x1xf32>
      %269 = arith.addf %258, %268 : vector<32x1xf32>
      %270 = vector.extract_strided_slice %97 {offsets = [0, 15], sizes = [32, 1], strides = [1, 1]} : vector<32x16xf32> to vector<32x1xf32>
      %c15_80 = arith.constant 15 : index
      %c0_81 = arith.constant 0 : index
      %271 = vector.load %arg7[%c15_80, %c0_81] : memref<16x16xf32, #tpu.memory_space<vmem>>, vector<1x16xf32>
      %272 = vector.broadcast %270 : vector<32x1xf32> to vector<32x16xf32>
      %273 = vector.broadcast %271 : vector<1x16xf32> to vector<32x16xf32>
      %274 = arith.mulf %272, %273 : vector<32x16xf32>
      %275 = arith.addf %264, %274 : vector<32x16xf32>
      %cst_82 = arith.constant 0.0909090936 : f32
      %276 = vector.broadcast %cst_82 : f32 to vector<32x1xf32>
      %277 = arith.mulf %269, %276 : vector<32x1xf32>
      %278 = arith.mulf %275, %97 : vector<32x16xf32>
      %cst_83 = arith.constant dense<0.000000e+00> : vector<32xf32>
      %279 = vector.multi_reduction <add>, %278, %cst_83 [1] : vector<32x16xf32> to vector<32xf32>
      %280 = vector.shape_cast %279 : vector<32xf32> to vector<32x1xf32>
      %cst_84 = arith.constant 0.0909090936 : f32
      %281 = vector.broadcast %cst_84 : f32 to vector<32x1xf32>
      %282 = arith.mulf %280, %281 : vector<32x1xf32>
      %283 = arith.mulf %277, %277 : vector<32x1xf32>
      %284 = arith.subf %282, %283 : vector<32x1xf32>
      %cst_85 = arith.constant 0.000000e+00 : f32
      %285 = vector.broadcast %cst_85 : f32 to vector<32x1xf32>
      %286 = arith.maximumf %284, %285 : vector<32x1xf32>
      %c0_86 = arith.constant 0 : index
      %c0_87 = arith.constant 0 : index
      %287 = vector.load %arg4[%c0_86, %c0_87] : memref<32x2xf32, #tpu.memory_space<vmem>>, vector<32x1xf32>
      %c0_88 = arith.constant 0 : index
      %c1_89 = arith.constant 1 : index
      %288 = vector.load %arg4[%c0_88, %c1_89] : memref<32x2xf32, #tpu.memory_space<vmem>>, vector<32x1xf32>
      %cst_90 = arith.constant 9.99999974E-6 : f32
      %289 = vector.broadcast %cst_90 : f32 to vector<32x1xf32>
      %290 = arith.addf %286, %289 : vector<32x1xf32>
      %291 = math.rsqrt %290 : vector<32x1xf32>
      %292 = arith.mulf %287, %291 : vector<32x1xf32>
      %293 = arith.mulf %277, %292 : vector<32x1xf32>
      %294 = arith.subf %288, %293 : vector<32x1xf32>
      %295 = tpu.concatenate %292, %294 in 1 : vector<32x1xf32>, vector<32x1xf32> -> vector<32x2xf32>
      %c0_91 = arith.constant 0 : index
      %c0_92 = arith.constant 0 : index
      %c0_93 = arith.constant 0 : index
      %296 = vector.load %arg5[%c0_91, %c0_92, %c0_93] : memref<1x32x2xf32, #tpu.memory_space<vmem>>, vector<1x32x2xf32>
      %297 = vector.shape_cast %296 : vector<1x32x2xf32> to vector<32x2xf32>
      %298 = vector.shape_cast %295 : vector<32x2xf32> to vector<1x32x2xf32>
      tpu.vector_store %arg5[%c0_91, %c0_92, %c0_93], %298 {strides = array<i32>} : memref<1x32x2xf32, #tpu.memory_space<vmem>>, vector<1x32x2xf32>,
    } else {
    }
    return
  }
  func.func @transform_0(%arg0: i32, %arg1: i32) -> (i32, i32, i32) {
    %c0_i32 = arith.constant 0 : i32
    %c0_i32_0 = arith.constant 0 : i32
    return %arg0, %c0_i32, %arg1 : i32, i32, i32
  }
  func.func @transform_1(%arg0: i32, %arg1: i32) -> (i32, i32) {
    %c0_i32 = arith.constant 0 : i32
    %c0_i32_0 = arith.constant 0 : i32
    %c0_i32_1 = arith.constant 0 : i32
    return %c0_i32, %c0_i32_0 : i32, i32
  }
  func.func @transform_2(%arg0: i32, %arg1: i32) -> (i32, i32) {
    %c0_i32 = arith.constant 0 : i32
    %c0_i32_0 = arith.constant 0 : i32
    %c0_i32_1 = arith.constant 0 : i32
    return %c0_i32, %c0_i32_0 : i32, i32
  }
  func.func @transform_3(%arg0: i32, %arg1: i32) -> (i32, i32, i32) {
    %c0_i32 = arith.constant 0 : i32
    %c0_i32_0 = arith.constant 0 : i32
    %c0_i32_1 = arith.constant 0 : i32
    return %arg0, %c0_i32, %c0_i32_0 : i32, i32, i32
  }
}

</mosaic_0001>

<llo_original>
// kernel: tpu_custom_call.1
$region0: #{tpu_custom_call.1}
  #allocation0 [shape = 'u32[]', space=smem, size = 0x4, offset = 0x4, fixed_abs, tag = 'smem constant byte address 0x4 - core index']
  #allocation1 [shape = 'u32[144,128]{1,0:T(1,128)}', space=vmem, size = 0x12000, scoped, tag = 'internal scratch']
  #allocation2 [shape = 'f32[16,1]{1,0:T(8,128)}', space=vmem, size = 0x2000, scoped, tag = 'scratch operand']
  #allocation3 [shape = 'f32[16,16]{1,0:T(8,128)}', space=vmem, size = 0x2000, scoped, tag = 'scratch operand']
  %s0 = inlined_call_operand.hbm [shape: f32[2,16,128], index: 0, kind: input, shape index: {}]
  %s1 = inlined_call_operand.hbm [shape: f32[32,16], index: 1, kind: input, shape index: {}]
  %s2 = inlined_call_operand.hbm [shape: f32[32,2], index: 2, kind: input, shape index: {}]
  %s3 = inlined_call_operand.hbm [shape: f32[2,32,2], index: 3, kind: output, shape index: {}]
  %s4 = sld [smem:[#allocation0]]
  $region65: #{tpu_custom_call.1} parent=0
    _
  %s6 = ssub.s32 1, %s4
  %s7 = scalar_select 0, %s6, %s4
  $region1: #{tpu_custom_call.1} parent=0
    #allocation4 [shape = 'u8[16384]{0}', space=vmem, size = 0x4000, scoped, tag = 'input window, operand 0']
    #allocation5 [shape = 's32[2]{0}', space=sflag, size = 0x8, scoped, tag = 'scoped memory for tpu_custom_call.1']
    #allocation6 [shape = 's32[2]{0}', space=sflag, size = 0x8, scoped, tag = 'scoped memory for tpu_custom_call.1']
    #allocation7 [shape = 'u8[16384]{0}', space=vmem, size = 0x4000, scoped, tag = 'input window, operand 1, single buffered']
    #allocation8 [shape = 's32[1]{0}', space=sflag, size = 0x4, scoped, tag = 'scoped memory for tpu_custom_call.1']
    #allocation9 [shape = 'u8[16384]{0}', space=vmem, size = 0x4000, scoped, tag = 'input window, operand 2, single buffered']
    #allocation10 [shape = 'u8[32768]{0}', space=vmem, size = 0x8000, scoped, tag = 'output window, operand 0']
    %8 = vsyncpa [#allocation5], 0
    %s9 = scalar_lea.sflag [#allocation5], 1
    %10 = vsyncpa %s9, 0
    %11 = vsyncpa [#allocation8], 0
    %12 = vsyncpa [#allocation6], 0
    %s13 = scalar_lea.sflag [#allocation6], 1
    %14 = vsyncpa %s13, 0
    loop: start=0, step=1, limit=4
    $region2: #{tpu_custom_call.1} parent=1 // loop_pre_header
      _
    $region3: #{tpu_custom_call.1} parent=1 // loop_header
      %s16 = sphi 0, %s20
      %p17 = scmp.ge.s32.totalorder %s16, 4
      %s23 = sphi 0, %s35
      %s24 = sphi 0, %s31
      %s25 = sphi 0, %s23
      %s26 = sphi 0, %s24
      %s27 = sphi 0, %s25
      %s28 = sphi 0, %s26
      %s40 = sphi 0, %s42
      %s43 = sphi 0, %s40
      %s44 = sphi 0, %s43
      %s60 = sphi 0, %s44
      %s64 = sphi 0, %s64
      %s66 = sphi 0, %s64
      %s67 = sphi 0, %s66
      %s81 = sphi 0, %s67
      %s85 = sphi 0, %s85
      %s87 = sphi 0, %s85
      %s88 = sphi 0, %s87
      %s102 = sphi 0, %s88
      %s108 = sphi 0, %s110
      %s111 = sphi 0, %s108
      %s112 = sphi 0, %s111
      %s128 = sphi 0, %s112
    $region4: #{tpu_custom_call.1} parent=1 // loop_header_branch
      %19 = sbr.rel (%p17) target = $region8
    $region5: #{tpu_custom_call.1} parent=1 // loop_body
      %s21 = ssub.s32 %s16, 1
      %s22 = ssub.s32 %s16, 2
      %s29 = sadd.s32 1, %s24
      %p30 = scmp.ge.s32.totalorder %s29, 1
      %s31 = scalar_select %p30, 0, %s29
      %s32 = sadd.s32 1, %s23
      %s33 = scalar_select %p30, %s32, %s23
      %p34 = scmp.ge.s32.totalorder %s33, 2
      %s35 = scalar_select %p34, 0, %s33
      %s36 = ssub.s32 %s23, %s35
      %s37 = ssub.s32 %s24, %s31
      %s38 = sor.u32 %s36, %s37
      %p39 = scmp.eq.s32.totalorder %s38, 0
      %s41 = sadd.s32 %s40, 1
      %s42 = scalar_select %p39, %s40, %s41
      %p45 = pneg %p39
      %p46 = scmp.eq.s32.totalorder %s16, 1
      %p47 = por %p45, %p46
      %p48 = scmp.ne.s32.totalorder %s40, %s43
      %p49 = scmp.eq.s32.totalorder %s16, 0
      %p50 = por %p48, %p49
      %p51 = scmp.ne.s32.totalorder %s40, %s43
      %p52 = scmp.eq.s32.totalorder %s21, 1
      %p53 = por %p51, %p52
      %p54 = scmp.ne.s32.totalorder %s43, %s44
      %p55 = scmp.eq.s32.totalorder %s21, 0
      %p56 = por %p54, %p55
      %p57 = scmp.ne.s32.totalorder %s43, %s44
      %p58 = scmp.eq.s32.totalorder %s22, 1
      %p59 = por %p57, %p58
      %p61 = scmp.ne.s32.totalorder %s44, %s60
      %p62 = scmp.eq.s32.totalorder %s22, 0
      %p63 = por %p61, %p62
      %s65 = sadd.s32 %s64, 1
      %p68 = scmp.eq.s32.totalorder %s16, 1
      %p69 = scmp.ne.s32.totalorder %s64, %s66
      %p70 = scmp.eq.s32.totalorder %s16, 0
      %p71 = por %p69, %p70
      %p72 = scmp.ne.s32.totalorder %s64, %s66
      %p73 = scmp.eq.s32.totalorder %s21, 1
      %p74 = por %p72, %p73
      %p75 = scmp.ne.s32.totalorder %s66, %s67
      %p76 = scmp.eq.s32.totalorder %s21, 0
      %p77 = por %p75, %p76
      %p78 = scmp.ne.s32.totalorder %s66, %s67
      %p79 = scmp.eq.s32.totalorder %s22, 1
      %p80 = por %p78, %p79
      %p82 = scmp.ne.s32.totalorder %s67, %s81
      %p83 = scmp.eq.s32.totalorder %s22, 0
      %p84 = por %p82, %p83
      %s86 = sadd.s32 %s85, 1
      %p89 = scmp.eq.s32.totalorder %s16, 1
      %p90 = scmp.ne.s32.totalorder %s85, %s87
      %p91 = scmp.eq.s32.totalorder %s16, 0
      %p92 = por %p90, %p91
      %p93 = scmp.ne.s32.totalorder %s85, %s87
      %p94 = scmp.eq.s32.totalorder %s21, 1
      %p95 = por %p93, %p94
      %p96 = scmp.ne.s32.totalorder %s87, %s88
      %p97 = scmp.eq.s32.totalorder %s21, 0
      %p98 = por %p96, %p97
      %p99 = scmp.ne.s32.totalorder %s87, %s88
      %p100 = scmp.eq.s32.totalorder %s22, 1
      %p101 = por %p99, %p100
      %p103 = scmp.ne.s32.totalorder %s88, %s102
      %p104 = scmp.eq.s32.totalorder %s22, 0
      %p105 = por %p103, %p104
      %s106 = ssub.s32 %s23, %s35
      %p107 = scmp.eq.s32.totalorder %s106, 0
      %s109 = sadd.s32 %s108, 1
      %s110 = scalar_select %p107, %s108, %s109
      %p113 = pneg %p107
      %p114 = scmp.eq.s32.totalorder %s16, 1
      %p115 = por %p113, %p114
      %p116 = scmp.ne.s32.totalorder %s108, %s111
      %p117 = scmp.eq.s32.totalorder %s16, 0
      %p118 = por %p116, %p117
      %p119 = scmp.ne.s32.totalorder %s108, %s111
      %p120 = scmp.eq.s32.totalorder %s21, 1
      %p121 = por %p119, %p120
      %p122 = scmp.ne.s32.totalorder %s111, %s112
      %p123 = scmp.eq.s32.totalorder %s21, 0
      %p124 = por %p122, %p123
      %p125 = scmp.ne.s32.totalorder %s111, %s112
      %p126 = scmp.eq.s32.totalorder %s22, 1
      %p127 = por %p125, %p126
      %p129 = scmp.ne.s32.totalorder %s112, %s128
      %p130 = scmp.eq.s32.totalorder %s22, 0
      %p131 = por %p129, %p130
      %p132 = scmp.le.s32.totalorder 1, %s16
      %p133 = scmp.lt.s32.totalorder %s16, 3
      %p134 = pnand %p132, %p133
      %p135 = pneg %p134
      // Predicated region
      $region9: #{tpu_custom_call.1} parent=5 // pred_check
        _
      $region10: #{tpu_custom_call.1} parent=5 // pred_check_branch
        %137 = sbr.rel (%p134) target = $region12
      $region11: #{tpu_custom_call.1} parent=5 // pred_region
        %s138 = ssub.s32 %s16, 1
        // Predicated region
        $region13: #{tpu_custom_call.1} parent=11 // pred_check
          %p139 = pneg %p77
        $region14: #{tpu_custom_call.1} parent=11 // pred_check_branch
          %141 = sbr.rel (%p139) target = $region16
        $region15: #{tpu_custom_call.1} parent=11 // pred_region
          %s143 = ssub.s32 512, 512
          %144 = vsyncadd [#allocation8], %s143
          %s145 = sshll.u32 [#allocation7], 4
          %s146 = int_to_ptr.vmem [resolvable:$true] %s145
          %151 = dma.hbm_to_vmem [thread:$0]  %s1, 512, %s146, [#allocation8], 128, 128, 8
        $region16: #{tpu_custom_call.1} parent=11 // pred_fallthru
          _
        // Predicated region
        $region17: #{tpu_custom_call.1} parent=11 // pred_check
          %p152 = pneg %p98
        $region18: #{tpu_custom_call.1} parent=11 // pred_check_branch
          %154 = sbr.rel (%p152) target = $region20
        $region19: #{tpu_custom_call.1} parent=11 // pred_region
          %s156 = ssub.s32 512, 512
          %157 = vsyncadd [#allocation8], %s156
          %s158 = sshll.u32 [#allocation9], 4
          %s159 = int_to_ptr.vmem [resolvable:$true] %s158
          %164 = dma.hbm_to_vmem [thread:$0]  %s2, 512, %s159, [#allocation8], 128, 128, 8
        $region20: #{tpu_custom_call.1} parent=11 // pred_fallthru
          _
      $region12: #{tpu_custom_call.1} parent=5 // pred_fallthru
        _
      %p165 = scmp.lt.s32.totalorder %s16, 2
      // Predicated region
      $region21: #{tpu_custom_call.1} parent=5 // pred_check
        %p166 = pneg %p165
      $region22: #{tpu_custom_call.1} parent=5 // pred_check_branch
        %168 = sbr.rel (%p166) target = $region24
      $region23: #{tpu_custom_call.1} parent=5 // pred_region
        // Predicated region
        $region25: #{tpu_custom_call.1} parent=23 // pred_check
          %p169 = pneg %p50
        $region26: #{tpu_custom_call.1} parent=23 // pred_check_branch
          %171 = sbr.rel (%p169) target = $region28
        $region27: #{tpu_custom_call.1} parent=23 // pred_region
          %s172 = sand.u32 %s40, 1
          %s173 = scalar_lea.sflag [#allocation5], %s172
          %s174 = sand.u32 %s40, 1
          %s175 = smul.addr %s174, 16
          %s176 = scalar_lea.vmem [#allocation4], %s175
          %s178 = ssub.s32 256, 256
          %179 = vsyncadd %s173, %s178
          %s180 = smul.addr %s23, 2
          %s181 = sadd.s32 %s24, %s180
          %s182 = smul.addr %s181, 128
          %s183 = scalar_lea.hbm %s0, %s182
          %s184 = sshll.u32 %s176, 4
          %s185 = int_to_ptr.vmem [resolvable:$true] %s184
          %190 = dma.hbm_to_vmem [thread:$0]  %s183, 256, %s185, %s173, 128, 128, 8
        $region28: #{tpu_custom_call.1} parent=23 // pred_fallthru
          _
      $region24: #{tpu_custom_call.1} parent=5 // pred_fallthru
        _
      %p191 = scmp.le.s32.totalorder 1, %s16
      %p192 = scmp.lt.s32.totalorder %s16, 3
      %p193 = pnand %p191, %p192
      %p194 = pneg %p193
      // Predicated region
      $region29: #{tpu_custom_call.1} parent=5 // pred_check
        _
      $region30: #{tpu_custom_call.1} parent=5 // pred_check_branch
        %196 = sbr.rel (%p193) target = $region32
      $region31: #{tpu_custom_call.1} parent=5 // pred_region
        %s197 = ssub.s32 %s16, 1
        %s198 = sand.u32 %s43, 1
        %s199 = scalar_lea.sflag [#allocation5], %s198
        %s200 = sand.u32 %s43, 1
        %s201 = smul.addr %s200, 16
        %s202 = scalar_lea.vmem [#allocation4], %s201
        // Predicated region
        $region33: #{tpu_custom_call.1} parent=31 // pred_check
          %p203 = pneg %p56
        $region34: #{tpu_custom_call.1} parent=31 // pred_check_branch
          %205 = sbr.rel (%p203) target = $region36
        $region35: #{tpu_custom_call.1} parent=31 // pred_region
          %206 = dma.done %s199, 256
        $region36: #{tpu_custom_call.1} parent=31 // pred_fallthru
          _
        // Predicated region
        $region37: #{tpu_custom_call.1} parent=31 // pred_check
          %p207 = pneg %p77
        $region38: #{tpu_custom_call.1} parent=31 // pred_check_branch
          %209 = sbr.rel (%p207) target = $region40
        $region39: #{tpu_custom_call.1} parent=31 // pred_region
          %210 = dma.done [#allocation8], 512
        $region40: #{tpu_custom_call.1} parent=31 // pred_fallthru
          _
        // Predicated region
        $region41: #{tpu_custom_call.1} parent=31 // pred_check
          %p211 = pneg %p98
        $region42: #{tpu_custom_call.1} parent=31 // pred_check_branch
          %213 = sbr.rel (%p211) target = $region44
        $region43: #{tpu_custom_call.1} parent=31 // pred_region
          %214 = dma.done [#allocation8], 512
        $region44: #{tpu_custom_call.1} parent=31 // pred_fallthru
          _
        %s215 = sand.u32 %s43, 1
        %s216 = scalar_lea.sflag [#allocation5], %s215
        %s217 = sand.u32 %s43, 1
        %s218 = smul.addr %s217, 16
        %s219 = scalar_lea.vmem [#allocation4], %s218
        %p220 = pneg %p56
        %p221 = pneg %p53
        %p222 = pneg %p77
        %p223 = pneg %p74
        %p224 = pneg %p98
        %p225 = pneg %p95
        %p226 = pneg %p124
        %p227 = pneg %p121
        %s228 = sand.u32 %s111, 1
        %s229 = scalar_lea.sflag [#allocation6], %s228
        %s230 = sand.u32 %s111, 1
        %s231 = smul.addr %s230, 32
        %s232 = scalar_lea.vmem [#allocation10], %s231
        %p233 = scmp.eq.s32.totalorder %s26, 0
        // Predicated region
        $region45: #{tpu_custom_call.1} parent=31 // pred_check
          %p234 = pneg %p233
        $region46: #{tpu_custom_call.1} parent=31 // pred_check_branch
          %236 = sbr.rel (%p234) target = $region48
        $region47: #{tpu_custom_call.1} parent=31 // pred_region
          %vm237 = vcmask 7168
          %238 = vst.msk [vmem:[#allocation2] sm:$0xff] %vm237, 0.0
          %239 = vst.msk [vmem:[#allocation2 + $0x8] sm:$0xff] %vm237, 0.0
          %vm240 = vcmask 130048
          %241 = vst.msk [vmem:[#allocation3] sm:$0xff] %vm240, 0.0
          %242 = vst.msk [vmem:[#allocation3 + $0x8] sm:$0xff] %vm240, 0.0
        $region48: #{tpu_custom_call.1} parent=31 // pred_fallthru
          _
        %v243 = vld [vmem:[%s202] sm:$0xff]
        %v244 = vld [vmem:[%s202 + $0x8] sm:$0xff]
        %v245 = vld [vmem:[#allocation2] sm:$0xff]
        %v246 = vld [vmem:[#allocation2 + $0x8] sm:$0xff]
        %247 = vadd.xlane.f32.xlu0 %v243
        %v248 = vpop.xlane.xlu0 %247
        %249 = vadd.xlane.f32.xlu0 %v244
        %v250 = vpop.xlane.xlu0 %249
        %v251 = vadd.f32 %v245, %v248
        %v252 = vadd.f32 %v246, %v250
        %vm253 = vcmask 7168
        %254 = vst.msk [vmem:[#allocation2] sm:$0xff] %vm253, %v251
        %255 = vst.msk [vmem:[#allocation2 + $0x8] sm:$0xff] %vm253, %v252
        %v256 = vlaneseq
        %v257 = vshrl.u32 %v256, 7
        %v258 = vsub.s32 0, %v257
        %v259 = vrot.slane %v243, %v258
        %v260 = vmul.f32 %v243, %v259
        %v261 = vmul.f32 %v244, %v259
        %262 = vadd.xlane.f32.xlu0 %v260
        %v263 = vpop.xlane.xlu0 %262
        %264 = vadd.xlane.f32.xlu0 %v261
        %v265 = vpop.xlane.xlu0 %264
        %v266 = vlaneseq
        %v267 = vshrl.u32 %v266, 7
        %v268 = vsub.s32 1, %v267
        %v269 = vrot.slane %v243, %v268
        %v270 = vmul.f32 %v243, %v269
        %v271 = vmul.f32 %v244, %v269
        %272 = vadd.xlane.f32.xlu0 %v270
        %v273 = vpop.xlane.xlu0 %272
        %274 = vadd.xlane.f32.xlu0 %v271
        %v275 = vpop.xlane.xlu0 %274
        %v276 = vlaneseq
        %v277 = vshrl.u32 %v276, 7
        %v278 = vsub.s32 2, %v277
        %v279 = vrot.slane %v243, %v278
        %v280 = vmul.f32 %v243, %v279
        %v281 = vmul.f32 %v244, %v279
        %282 = vadd.xlane.f32.xlu0 %v280
        %v283 = vpop.xlane.xlu0 %282
        %284 = vadd.xlane.f32.xlu0 %v281
        %v285 = vpop.xlane.xlu0 %284
        %v286 = vlaneseq
        %v287 = vshrl.u32 %v286, 7
        %v288 = vsub.s32 3, %v287
        %v289 = vrot.slane %v243, %v288
        %v290 = vmul.f32 %v243, %v289
        %v291 = vmul.f32 %v244, %v289
        %292 = vadd.xlane.f32.xlu0 %v290
        %v293 = vpop.xlane.xlu0 %292
        %294 = vadd.xlane.f32.xlu0 %v291
        %v295 = vpop.xlane.xlu0 %294
        %v296 = vlaneseq
        %v297 = vshrl.u32 %v296, 7
        %v298 = vsub.s32 4, %v297
        %v299 = vrot.slane %v243, %v298
        %v300 = vmul.f32 %v243, %v299
        %v301 = vmul.f32 %v244, %v299
        %302 = vadd.xlane.f32.xlu0 %v300
        %v303 = vpop.xlane.xlu0 %302
        %304 = vadd.xlane.f32.xlu0 %v301
        %v305 = vpop.xlane.xlu0 %304
        %v306 = vlaneseq
        %v307 = vshrl.u32 %v306, 7
        %v308 = vsub.s32 5, %v307
        %v309 = vrot.slane %v243, %v308
        %v310 = vmul.f32 %v243, %v309
        %v311 = vmul.f32 %v244, %v309
        %312 = vadd.xlane.f32.xlu0 %v310
        %v313 = vpop.xlane.xlu0 %312
        %314 = vadd.xlane.f32.xlu0 %v311
        %v315 = vpop.xlane.xlu0 %314
        %v316 = vlaneseq
        %v317 = vshrl.u32 %v316, 7
        %v318 = vsub.s32 6, %v317
        %v319 = vrot.slane %v243, %v318
        %v320 = vmul.f32 %v243, %v319
        %v321 = vmul.f32 %v244, %v319
        %322 = vadd.xlane.f32.xlu0 %v320
        %v323 = vpop.xlane.xlu0 %322
        %324 = vadd.xlane.f32.xlu0 %v321
        %v325 = vpop.xlane.xlu0 %324
        %v326 = vlaneseq
        %v327 = vshrl.u32 %v326, 7
        %v328 = vsub.s32 7, %v327
        %v329 = vrot.slane %v243, %v328
        %v330 = vmul.f32 %v243, %v329
        %v331 = vmul.f32 %v244, %v329
        %332 = vadd.xlane.f32.xlu0 %v330
        %v333 = vpop.xlane.xlu0 %332
        %334 = vadd.xlane.f32.xlu0 %v331
        %v335 = vpop.xlane.xlu0 %334
        %v336 = vlaneseq
        %v337 = vshrl.u32 %v336, 7
        %v338 = vsub.s32 0, %v337
        %v339 = vrot.slane %v244, %v338
        %v340 = vmul.f32 %v243, %v339
        %v341 = vmul.f32 %v244, %v339
        %342 = vadd.xlane.f32.xlu0 %v340
        %v343 = vpop.xlane.xlu0 %342
        %344 = vadd.xlane.f32.xlu0 %v341
        %v345 = vpop.xlane.xlu0 %344
        %v346 = vlaneseq
        %v347 = vshrl.u32 %v346, 7
        %v348 = vsub.s32 1, %v347
        %v349 = vrot.slane %v244, %v348
        %v350 = vmul.f32 %v243, %v349
        %v351 = vmul.f32 %v244, %v349
        %352 = vadd.xlane.f32.xlu0 %v350
        %v353 = vpop.xlane.xlu0 %352
        %354 = vadd.xlane.f32.xlu0 %v351
        %v355 = vpop.xlane.xlu0 %354
        %v356 = vlaneseq
        %v357 = vshrl.u32 %v356, 7
        %v358 = vsub.s32 2, %v357
        %v359 = vrot.slane %v244, %v358
        %v360 = vmul.f32 %v243, %v359
        %v361 = vmul.f32 %v244, %v359
        %362 = vadd.xlane.f32.xlu0 %v360
        %v363 = vpop.xlane.xlu0 %362
        %364 = vadd.xlane.f32.xlu0 %v361
        %v365 = vpop.xlane.xlu0 %364
        %v366 = vlaneseq
        %v367 = vshrl.u32 %v366, 7
        %v368 = vsub.s32 3, %v367
        %v369 = vrot.slane %v244, %v368
        %v370 = vmul.f32 %v243, %v369
        %v371 = vmul.f32 %v244, %v369
        %372 = vadd.xlane.f32.xlu0 %v370
        %v373 = vpop.xlane.xlu0 %372
        %374 = vadd.xlane.f32.xlu0 %v371
        %v375 = vpop.xlane.xlu0 %374
        %v376 = vlaneseq
        %v377 = vshrl.u32 %v376, 7
        %v378 = vsub.s32 4, %v377
        %v379 = vrot.slane %v244, %v378
        %v380 = vmul.f32 %v243, %v379
        %v381 = vmul.f32 %v244, %v379
        %382 = vadd.xlane.f32.xlu0 %v380
        %v383 = vpop.xlane.xlu0 %382
        %384 = vadd.xlane.f32.xlu0 %v381
        %v385 = vpop.xlane.xlu0 %384
        %v386 = vlaneseq
        %v387 = vshrl.u32 %v386, 7
        %v388 = vsub.s32 5, %v387
        %v389 = vrot.slane %v244, %v388
        %v390 = vmul.f32 %v243, %v389
        %v391 = vmul.f32 %v244, %v389
        %392 = vadd.xlane.f32.xlu0 %v390
        %v393 = vpop.xlane.xlu0 %392
        %394 = vadd.xlane.f32.xlu0 %v391
        %v395 = vpop.xlane.xlu0 %394
        %v396 = vlaneseq
        %v397 = vshrl.u32 %v396, 7
        %v398 = vsub.s32 6, %v397
        %v399 = vrot.slane %v244, %v398
        %v400 = vmul.f32 %v243, %v399
        %v401 = vmul.f32 %v244, %v399
        %402 = vadd.xlane.f32.xlu0 %v400
        %v403 = vpop.xlane.xlu0 %402
        %404 = vadd.xlane.f32.xlu0 %v401
        %v405 = vpop.xlane.xlu0 %404
        %v406 = vlaneseq
        %v407 = vshrl.u32 %v406, 7
        %v408 = vsub.s32 7, %v407
        %v409 = vrot.slane %v244, %v408
        %v410 = vmul.f32 %v243, %v409
        %v411 = vmul.f32 %v244, %v409
        %412 = vadd.xlane.f32.xlu0 %v410
        %v413 = vpop.xlane.xlu0 %412
        %414 = vadd.xlane.f32.xlu0 %v411
        %v415 = vpop.xlane.xlu0 %414
        %v416 = vld [vmem:[#allocation3] sm:$0xff]
        %v417 = vld [vmem:[#allocation3 + $0x8] sm:$0xff]
        %v418 = vsel %vm253, %v263, %v273
        %v419 = vsel %vm253, %v265, %v275
        %vm420 = vcmask 15360
        %v421 = vsel %vm420, %v418, %v283
        %v422 = vsel %vm420, %v419, %v285
        %vm423 = vcmask 23552
        %v424 = vsel %vm423, %v421, %v293
        %v425 = vsel %vm423, %v422, %v295
        %vm426 = vcmask 31744
        %v427 = vsel %vm426, %v424, %v303
        %v428 = vsel %vm426, %v425, %v305
        %vm429 = vcmask 39936
        %v430 = vsel %vm429, %v427, %v313
        %v431 = vsel %vm429, %v428, %v315
        %vm432 = vcmask 48128
        %v433 = vsel %vm432, %v430, %v323
        %v434 = vsel %vm432, %v431, %v325
        %vm435 = vcmask 56320
        %v436 = vsel %vm435, %v433, %v333
        %v437 = vsel %vm435, %v434, %v335
        %vm438 = vcmask 64512
        %v439 = vsel %vm438, %v436, %v343
        %v440 = vsel %vm438, %v437, %v345
        %vm441 = vcmask 72704
        %v442 = vsel %vm441, %v439, %v353
        %v443 = vsel %vm441, %v440, %v355
        %vm444 = vcmask 80896
        %v445 = vsel %vm444, %v442, %v363
        %v446 = vsel %vm444, %v443, %v365
        %vm447 = vcmask 89088
        %v448 = vsel %vm447, %v445, %v373
        %v449 = vsel %vm447, %v446, %v375
        %vm450 = vcmask 97280
        %v451 = vsel %vm450, %v448, %v383
        %v452 = vsel %vm450, %v449, %v385
        %vm453 = vcmask 105472
        %v454 = vsel %vm453, %v451, %v393
        %v455 = vsel %vm453, %v452, %v395
        %vm456 = vcmask 113664
        %v457 = vsel %vm456, %v454, %v403
        %v458 = vsel %vm456, %v455, %v405
        %vm459 = vcmask 121856
        %v460 = vsel %vm459, %v457, %v413
        %v461 = vsel %vm459, %v458, %v415
        %v462 = vadd.f32 %v416, %v460
        %v463 = vadd.f32 %v417, %v461
        %vm464 = vcmask 130048
        %465 = vst.msk [vmem:[#allocation3] sm:$0xff] %vm464, %v462
        %466 = vst.msk [vmem:[#allocation3 + $0x8] sm:$0xff] %vm464, %v463
        // Predicated region
        $region49: #{tpu_custom_call.1} parent=31 // pred_check
          %p467 = pneg %p233
        $region50: #{tpu_custom_call.1} parent=31 // pred_check_branch
          %469 = sbr.rel (%p467) target = $region52
        $region51: #{tpu_custom_call.1} parent=31 // pred_region
          %v470 = vld [vmem:[#allocation7] sm:$0xff]
          %v471 = vld [vmem:[#allocation7 + $0x8] sm:$0xff]
          %v472 = vld [vmem:[#allocation7 + $0x10] sm:$0xff]
          %v473 = vld [vmem:[#allocation7 + $0x18] sm:$0xff]
          %v474 = vld [vmem:[#allocation2] sm:$0x1]
          %v475 = vlaneseq
          %v476 = vshrl.u32 %v475, 7
          %v477 = vsub.s32 0, %v476
          %v478 = vrot.slane %v474, %v477
          %v479 = vmul.f32 %v470, %v478
          %v480 = vmul.f32 %v471, %v478
          %v481 = vmul.f32 %v472, %v478
          %v482 = vmul.f32 %v473, %v478
          %v483 = vadd.f32 %v479, 0.0
          %v484 = vadd.f32 %v480, 0.0
          %v485 = vadd.f32 %v481, 0.0
          %v486 = vadd.f32 %v482, 0.0
          %v487 = vld [vmem:[#allocation3] sm:$0x1]
          %489 = vset.pattern.permute.xlu0 0
          %490 = vperm.xlu0 %489, %v470
          %v491 = vpop.permute.xlu0 %490
          %494 = vset.pattern.permute.xlu0 0
          %495 = vperm.xlu0 %494, %v471
          %v496 = vpop.permute.xlu0 %495
          %499 = vset.pattern.permute.xlu0 0
          %500 = vperm.xlu0 %499, %v472
          %v501 = vpop.permute.xlu0 %500
          %504 = vset.pattern.permute.xlu0 0
          %505 = vperm.xlu0 %504, %v473
          %v506 = vpop.permute.xlu0 %505
          %v508 = vlaneseq
          %v509 = vshrl.u32 %v508, 7
          %v510 = vsub.s32 0, %v509
          %v511 = vrot.slane %v487, %v510
          %v512 = vmul.f32 %v491, %v511
          %v513 = vmul.f32 %v496, %v511
          %v514 = vmul.f32 %v501, %v511
          %v515 = vmul.f32 %v506, %v511
          %v516 = vadd.f32 %v512, 0.0
          %v517 = vadd.f32 %v513, 0.0
          %v518 = vadd.f32 %v514, 0.0
          %v519 = vadd.f32 %v515, 0.0
          %v520 = vld [vmem:[#allocation2 + $0x1] sm:$0x1]
          %v521 = vlaneseq
          %v522 = vshrl.u32 %v521, 7
          %v523 = vsub.s32 0, %v522
          %v524 = vrot.slane %v520, %v523
          %526 = vrot.lane.b32.xlu0 %v524, 1
          %v527 = vpop.permute.xlu0 %526
          %v529 = vmul.f32 %v470, %v527
          %v530 = vmul.f32 %v471, %v527
          %v531 = vmul.f32 %v472, %v527
          %v532 = vmul.f32 %v473, %v527
          %537 = vrot.lane.b32.xlu0 %v529, 127
          %v538 = vpop.permute.xlu0 %537
          %539 = vrot.lane.b32.xlu0 %v530, 127
          %v540 = vpop.permute.xlu0 %539
          %541 = vrot.lane.b32.xlu0 %v531, 127
          %v542 = vpop.permute.xlu0 %541
          %543 = vrot.lane.b32.xlu0 %v532, 127
          %v544 = vpop.permute.xlu0 %543
          %v549 = vadd.f32 %v483, %v538
          %v550 = vadd.f32 %v484, %v540
          %v551 = vadd.f32 %v485, %v542
          %v552 = vadd.f32 %v486, %v544
          %v553 = vld [vmem:[#allocation3 + $0x1] sm:$0x1]
          %554 = vset.pattern.permute.xlu0 1
          %555 = vperm.xlu0 %554, %v470
          %v556 = vpop.permute.xlu0 %555
          %558 = vset.pattern.permute.xlu0 1
          %559 = vperm.xlu0 %558, %v471
          %v560 = vpop.permute.xlu0 %559
          %562 = vset.pattern.permute.xlu0 1
          %563 = vperm.xlu0 %562, %v472
          %v564 = vpop.permute.xlu0 %563
          %566 = vset.pattern.permute.xlu0 1
          %567 = vperm.xlu0 %566, %v473
          %v568 = vpop.permute.xlu0 %567
          %v570 = vlaneseq
          %v571 = vshrl.u32 %v570, 7
          %v572 = vsub.s32 0, %v571
          %v573 = vrot.slane %v553, %v572
          %v574 = vmul.f32 %v556, %v573
          %v575 = vmul.f32 %v560, %v573
          %v576 = vmul.f32 %v564, %v573
          %v577 = vmul.f32 %v568, %v573
          %v578 = vadd.f32 %v516, %v574
          %v579 = vadd.f32 %v517, %v575
          %v580 = vadd.f32 %v518, %v576
          %v581 = vadd.f32 %v519, %v577
          %v582 = vld [vmem:[#allocation2 + $0x2] sm:$0x1]
          %v583 = vlaneseq
          %v584 = vshrl.u32 %v583, 7
          %v585 = vsub.s32 0, %v584
          %v586 = vrot.slane %v582, %v585
          %588 = vrot.lane.b32.xlu0 %v586, 2
          %v589 = vpop.permute.xlu0 %588
          %v591 = vmul.f32 %v470, %v589
          %v592 = vmul.f32 %v471, %v589
          %v593 = vmul.f32 %v472, %v589
          %v594 = vmul.f32 %v473, %v589
          %599 = vrot.lane.b32.xlu0 %v591, 126
          %v600 = vpop.permute.xlu0 %599
          %601 = vrot.lane.b32.xlu0 %v592, 126
          %v602 = vpop.permute.xlu0 %601
          %603 = vrot.lane.b32.xlu0 %v593, 126
          %v604 = vpop.permute.xlu0 %603
          %605 = vrot.lane.b32.xlu0 %v594, 126
          %v606 = vpop.permute.xlu0 %605
          %v611 = vadd.f32 %v549, %v600
          %v612 = vadd.f32 %v550, %v602
          %v613 = vadd.f32 %v551, %v604
          %v614 = vadd.f32 %v552, %v606
          %v615 = vld [vmem:[#allocation3 + $0x2] sm:$0x1]
          %616 = vset.pattern.permute.xlu0 2
          %617 = vperm.xlu0 %616, %v470
          %v618 = vpop.permute.xlu0 %617
          %620 = vset.pattern.permute.xlu0 2
          %621 = vperm.xlu0 %620, %v471
          %v622 = vpop.permute.xlu0 %621
          %624 = vset.pattern.permute.xlu0 2
          %625 = vperm.xlu0 %624, %v472
          %v626 = vpop.permute.xlu0 %625
          %628 = vset.pattern.permute.xlu0 2
          %629 = vperm.xlu0 %628, %v473
          %v630 = vpop.permute.xlu0 %629
          %v632 = vlaneseq
          %v633 = vshrl.u32 %v632, 7
          %v634 = vsub.s32 0, %v633
          %v635 = vrot.slane %v615, %v634
          %v636 = vmul.f32 %v618, %v635
          %v637 = vmul.f32 %v622, %v635
          %v638 = vmul.f32 %v626, %v635
          %v639 = vmul.f32 %v630, %v635
          %v640 = vadd.f32 %v578, %v636
          %v641 = vadd.f32 %v579, %v637
          %v642 = vadd.f32 %v580, %v638
          %v643 = vadd.f32 %v581, %v639
          %v644 = vld [vmem:[#allocation2 + $0x3] sm:$0x1]
          %v645 = vlaneseq
          %v646 = vshrl.u32 %v645, 7
          %v647 = vsub.s32 0, %v646
          %v648 = vrot.slane %v644, %v647
          %650 = vrot.lane.b32.xlu0 %v648, 3
          %v651 = vpop.permute.xlu0 %650
          %v653 = vmul.f32 %v470, %v651
          %v654 = vmul.f32 %v471, %v651
          %v655 = vmul.f32 %v472, %v651
          %v656 = vmul.f32 %v473, %v651
          %661 = vrot.lane.b32.xlu0 %v653, 125
          %v662 = vpop.permute.xlu0 %661
          %663 = vrot.lane.b32.xlu0 %v654, 125
          %v664 = vpop.permute.xlu0 %663
          %665 = vrot.lane.b32.xlu0 %v655, 125
          %v666 = vpop.permute.xlu0 %665
          %667 = vrot.lane.b32.xlu0 %v656, 125
          %v668 = vpop.permute.xlu0 %667
          %v673 = vadd.f32 %v611, %v662
          %v674 = vadd.f32 %v612, %v664
          %v675 = vadd.f32 %v613, %v666
          %v676 = vadd.f32 %v614, %v668
          %v677 = vld [vmem:[#allocation3 + $0x3] sm:$0x1]
          %678 = vset.pattern.permute.xlu0 3
          %679 = vperm.xlu0 %678, %v470
          %v680 = vpop.permute.xlu0 %679
          %682 = vset.pattern.permute.xlu0 3
          %683 = vperm.xlu0 %682, %v471
          %v684 = vpop.permute.xlu0 %683
          %686 = vset.pattern.permute.xlu0 3
          %687 = vperm.xlu0 %686, %v472
          %v688 = vpop.permute.xlu0 %687
          %690 = vset.pattern.permute.xlu0 3
          %691 = vperm.xlu0 %690, %v473
          %v692 = vpop.permute.xlu0 %691
          %v694 = vlaneseq
          %v695 = vshrl.u32 %v694, 7
          %v696 = vsub.s32 0, %v695
          %v697 = vrot.slane %v677, %v696
          %v698 = vmul.f32 %v680, %v697
          %v699 = vmul.f32 %v684, %v697
          %v700 = vmul.f32 %v688, %v697
          %v701 = vmul.f32 %v692, %v697
          %v702 = vadd.f32 %v640, %v698
          %v703 = vadd.f32 %v641, %v699
          %v704 = vadd.f32 %v642, %v700
          %v705 = vadd.f32 %v643, %v701
          %v706 = vld [vmem:[#allocation2 + $0x4] sm:$0x1]
          %v707 = vlaneseq
          %v708 = vshrl.u32 %v707, 7
          %v709 = vsub.s32 0, %v708
          %v710 = vrot.slane %v706, %v709
          %712 = vrot.lane.b32.xlu0 %v710, 4
          %v713 = vpop.permute.xlu0 %712
          %v715 = vmul.f32 %v470, %v713
          %v716 = vmul.f32 %v471, %v713
          %v717 = vmul.f32 %v472, %v713
          %v718 = vmul.f32 %v473, %v713
          %723 = vrot.lane.b32.xlu0 %v715, 124
          %v724 = vpop.permute.xlu0 %723
          %725 = vrot.lane.b32.xlu0 %v716, 124
          %v726 = vpop.permute.xlu0 %725
          %727 = vrot.lane.b32.xlu0 %v717, 124
          %v728 = vpop.permute.xlu0 %727
          %729 = vrot.lane.b32.xlu0 %v718, 124
          %v730 = vpop.permute.xlu0 %729
          %v735 = vadd.f32 %v673, %v724
          %v736 = vadd.f32 %v674, %v726
          %v737 = vadd.f32 %v675, %v728
          %v738 = vadd.f32 %v676, %v730
          %v739 = vld [vmem:[#allocation3 + $0x4] sm:$0x1]
          %740 = vset.pattern.permute.xlu0 4
          %741 = vperm.xlu0 %740, %v470
          %v742 = vpop.permute.xlu0 %741
          %744 = vset.pattern.permute.xlu0 4
          %745 = vperm.xlu0 %744, %v471
          %v746 = vpop.permute.xlu0 %745
          %748 = vset.pattern.permute.xlu0 4
          %749 = vperm.xlu0 %748, %v472
          %v750 = vpop.permute.xlu0 %749
          %752 = vset.pattern.permute.xlu0 4
          %753 = vperm.xlu0 %752, %v473
          %v754 = vpop.permute.xlu0 %753
          %v756 = vlaneseq
          %v757 = vshrl.u32 %v756, 7
          %v758 = vsub.s32 0, %v757
          %v759 = vrot.slane %v739, %v758
          %v760 = vmul.f32 %v742, %v759
          %v761 = vmul.f32 %v746, %v759
          %v762 = vmul.f32 %v750, %v759
          %v763 = vmul.f32 %v754, %v759
          %v764 = vadd.f32 %v702, %v760
          %v765 = vadd.f32 %v703, %v761
          %v766 = vadd.f32 %v704, %v762
          %v767 = vadd.f32 %v705, %v763
          %v768 = vld [vmem:[#allocation2 + $0x5] sm:$0x1]
          %v769 = vlaneseq
          %v770 = vshrl.u32 %v769, 7
          %v771 = vsub.s32 0, %v770
          %v772 = vrot.slane %v768, %v771
          %774 = vrot.lane.b32.xlu0 %v772, 5
          %v775 = vpop.permute.xlu0 %774
          %v777 = vmul.f32 %v470, %v775
          %v778 = vmul.f32 %v471, %v775
          %v779 = vmul.f32 %v472, %v775
          %v780 = vmul.f32 %v473, %v775
          %785 = vrot.lane.b32.xlu0 %v777, 123
          %v786 = vpop.permute.xlu0 %785
          %787 = vrot.lane.b32.xlu0 %v778, 123
          %v788 = vpop.permute.xlu0 %787
          %789 = vrot.lane.b32.xlu0 %v779, 123
          %v790 = vpop.permute.xlu0 %789
          %791 = vrot.lane.b32.xlu0 %v780, 123
          %v792 = vpop.permute.xlu0 %791
          %v797 = vadd.f32 %v735, %v786
          %v798 = vadd.f32 %v736, %v788
          %v799 = vadd.f32 %v737, %v790
          %v800 = vadd.f32 %v738, %v792
          %v801 = vld [vmem:[#allocation3 + $0x5] sm:$0x1]
          %802 = vset.pattern.permute.xlu0 5
          %803 = vperm.xlu0 %802, %v470
          %v804 = vpop.permute.xlu0 %803
          %806 = vset.pattern.permute.xlu0 5
          %807 = vperm.xlu0 %806, %v471
          %v808 = vpop.permute.xlu0 %807
          %810 = vset.pattern.permute.xlu0 5
          %811 = vperm.xlu0 %810, %v472
          %v812 = vpop.permute.xlu0 %811
          %814 = vset.pattern.permute.xlu0 5
          %815 = vperm.xlu0 %814, %v473
          %v816 = vpop.permute.xlu0 %815
          %v818 = vlaneseq
          %v819 = vshrl.u32 %v818, 7
          %v820 = vsub.s32 0, %v819
          %v821 = vrot.slane %v801, %v820
          %v822 = vmul.f32 %v804, %v821
          %v823 = vmul.f32 %v808, %v821
          %v824 = vmul.f32 %v812, %v821
          %v825 = vmul.f32 %v816, %v821
          %v826 = vadd.f32 %v764, %v822
          %v827 = vadd.f32 %v765, %v823
          %v828 = vadd.f32 %v766, %v824
          %v829 = vadd.f32 %v767, %v825
          %v830 = vld [vmem:[#allocation2 + $0x6] sm:$0x1]
          %v831 = vlaneseq
          %v832 = vshrl.u32 %v831, 7
          %v833 = vsub.s32 0, %v832
          %v834 = vrot.slane %v830, %v833
          %836 = vrot.lane.b32.xlu0 %v834, 6
          %v837 = vpop.permute.xlu0 %836
          %v839 = vmul.f32 %v470, %v837
          %v840 = vmul.f32 %v471, %v837
          %v841 = vmul.f32 %v472, %v837
          %v842 = vmul.f32 %v473, %v837
          %847 = vrot.lane.b32.xlu0 %v839, 122
          %v848 = vpop.permute.xlu0 %847
          %849 = vrot.lane.b32.xlu0 %v840, 122
          %v850 = vpop.permute.xlu0 %849
          %851 = vrot.lane.b32.xlu0 %v841, 122
          %v852 = vpop.permute.xlu0 %851
          %853 = vrot.lane.b32.xlu0 %v842, 122
          %v854 = vpop.permute.xlu0 %853
          %v859 = vadd.f32 %v797, %v848
          %v860 = vadd.f32 %v798, %v850
          %v861 = vadd.f32 %v799, %v852
          %v862 = vadd.f32 %v800, %v854
          %v863 = vld [vmem:[#allocation3 + $0x6] sm:$0x1]
          %864 = vset.pattern.permute.xlu0 6
          %865 = vperm.xlu0 %864, %v470
          %v866 = vpop.permute.xlu0 %865
          %868 = vset.pattern.permute.xlu0 6
          %869 = vperm.xlu0 %868, %v471
          %v870 = vpop.permute.xlu0 %869
          %872 = vset.pattern.permute.xlu0 6
          %873 = vperm.xlu0 %872, %v472
          %v874 = vpop.permute.xlu0 %873
          %876 = vset.pattern.permute.xlu0 6
          %877 = vperm.xlu0 %876, %v473
          %v878 = vpop.permute.xlu0 %877
          %v880 = vlaneseq
          %v881 = vshrl.u32 %v880, 7
          %v882 = vsub.s32 0, %v881
          %v883 = vrot.slane %v863, %v882
          %v884 = vmul.f32 %v866, %v883
          %v885 = vmul.f32 %v870, %v883
          %v886 = vmul.f32 %v874, %v883
          %v887 = vmul.f32 %v878, %v883
          %v888 = vadd.f32 %v826, %v884
          %v889 = vadd.f32 %v827, %v885
          %v890 = vadd.f32 %v828, %v886
          %v891 = vadd.f32 %v829, %v887
          %v892 = vld [vmem:[#allocation2 + $0x7] sm:$0x1]
          %v893 = vlaneseq
          %v894 = vshrl.u32 %v893, 7
          %v895 = vsub.s32 0, %v894
          %v896 = vrot.slane %v892, %v895
          %898 = vrot.lane.b32.xlu0 %v896, 7
          %v899 = vpop.permute.xlu0 %898
          %v901 = vmul.f32 %v470, %v899
          %v902 = vmul.f32 %v471, %v899
          %v903 = vmul.f32 %v472, %v899
          %v904 = vmul.f32 %v473, %v899
          %909 = vrot.lane.b32.xlu0 %v901, 121
          %v910 = vpop.permute.xlu0 %909
          %911 = vrot.lane.b32.xlu0 %v902, 121
          %v912 = vpop.permute.xlu0 %911
          %913 = vrot.lane.b32.xlu0 %v903, 121
          %v914 = vpop.permute.xlu0 %913
          %915 = vrot.lane.b32.xlu0 %v904, 121
          %v916 = vpop.permute.xlu0 %915
          %v921 = vadd.f32 %v859, %v910
          %v922 = vadd.f32 %v860, %v912
          %v923 = vadd.f32 %v861, %v914
          %v924 = vadd.f32 %v862, %v916
          %v925 = vld [vmem:[#allocation3 + $0x7] sm:$0x1]
          %926 = vset.pattern.permute.xlu0 7
          %927 = vperm.xlu0 %926, %v470
          %v928 = vpop.permute.xlu0 %927
          %930 = vset.pattern.permute.xlu0 7
          %931 = vperm.xlu0 %930, %v471
          %v932 = vpop.permute.xlu0 %931
          %934 = vset.pattern.permute.xlu0 7
          %935 = vperm.xlu0 %934, %v472
          %v936 = vpop.permute.xlu0 %935
          %938 = vset.pattern.permute.xlu0 7
          %939 = vperm.xlu0 %938, %v473
          %v940 = vpop.permute.xlu0 %939
          %v942 = vlaneseq
          %v943 = vshrl.u32 %v942, 7
          %v944 = vsub.s32 0, %v943
          %v945 = vrot.slane %v925, %v944
          %v946 = vmul.f32 %v928, %v945
          %v947 = vmul.f32 %v932, %v945
          %v948 = vmul.f32 %v936, %v945
          %v949 = vmul.f32 %v940, %v945
          %v950 = vadd.f32 %v888, %v946
          %v951 = vadd.f32 %v889, %v947
          %v952 = vadd.f32 %v890, %v948
          %v953 = vadd.f32 %v891, %v949
          %v954 = vld [vmem:[#allocation2 + $0x8] sm:$0x1]
          %v955 = vlaneseq
          %v956 = vshrl.u32 %v955, 7
          %v957 = vsub.s32 0, %v956
          %v958 = vrot.slane %v954, %v957
          %960 = vrot.lane.b32.xlu0 %v958, 8
          %v961 = vpop.permute.xlu0 %960
          %v963 = vmul.f32 %v470, %v961
          %v964 = vmul.f32 %v471, %v961
          %v965 = vmul.f32 %v472, %v961
          %v966 = vmul.f32 %v473, %v961
          %971 = vrot.lane.b32.xlu0 %v963, 120
          %v972 = vpop.permute.xlu0 %971
          %973 = vrot.lane.b32.xlu0 %v964, 120
          %v974 = vpop.permute.xlu0 %973
          %975 = vrot.lane.b32.xlu0 %v965, 120
          %v976 = vpop.permute.xlu0 %975
          %977 = vrot.lane.b32.xlu0 %v966, 120
          %v978 = vpop.permute.xlu0 %977
          %v983 = vadd.f32 %v921, %v972
          %v984 = vadd.f32 %v922, %v974
          %v985 = vadd.f32 %v923, %v976
          %v986 = vadd.f32 %v924, %v978
          %v987 = vld [vmem:[#allocation3 + $0x8] sm:$0x1]
          %988 = vset.pattern.permute.xlu0 8
          %989 = vperm.xlu0 %988, %v470
          %v990 = vpop.permute.xlu0 %989
          %992 = vset.pattern.permute.xlu0 8
          %993 = vperm.xlu0 %992, %v471
          %v994 = vpop.permute.xlu0 %993
          %996 = vset.pattern.permute.xlu0 8
          %997 = vperm.xlu0 %996, %v472
          %v998 = vpop.permute.xlu0 %997
          %1000 = vset.pattern.permute.xlu0 8
          %1001 = vperm.xlu0 %1000, %v473
          %v1002 = vpop.permute.xlu0 %1001
          %v1004 = vlaneseq
          %v1005 = vshrl.u32 %v1004, 7
          %v1006 = vsub.s32 0, %v1005
          %v1007 = vrot.slane %v987, %v1006
          %v1008 = vmul.f32 %v990, %v1007
          %v1009 = vmul.f32 %v994, %v1007
          %v1010 = vmul.f32 %v998, %v1007
          %v1011 = vmul.f32 %v1002, %v1007
          %v1012 = vadd.f32 %v950, %v1008
          %v1013 = vadd.f32 %v951, %v1009
          %v1014 = vadd.f32 %v952, %v1010
          %v1015 = vadd.f32 %v953, %v1011
          %v1016 = vld [vmem:[#allocation2 + $0x9] sm:$0x1]
          %v1017 = vlaneseq
          %v1018 = vshrl.u32 %v1017, 7
          %v1019 = vsub.s32 0, %v1018
          %v1020 = vrot.slane %v1016, %v1019
          %1022 = vrot.lane.b32.xlu0 %v1020, 9
          %v1023 = vpop.permute.xlu0 %1022
          %v1025 = vmul.f32 %v470, %v1023
          %v1026 = vmul.f32 %v471, %v1023
          %v1027 = vmul.f32 %v472, %v1023
          %v1028 = vmul.f32 %v473, %v1023
          %1033 = vrot.lane.b32.xlu0 %v1025, 119
          %v1034 = vpop.permute.xlu0 %1033
          %1035 = vrot.lane.b32.xlu0 %v1026, 119
          %v1036 = vpop.permute.xlu0 %1035
          %1037 = vrot.lane.b32.xlu0 %v1027, 119
          %v1038 = vpop.permute.xlu0 %1037
          %1039 = vrot.lane.b32.xlu0 %v1028, 119
          %v1040 = vpop.permute.xlu0 %1039
          %v1045 = vadd.f32 %v983, %v1034
          %v1046 = vadd.f32 %v984, %v1036
          %v1047 = vadd.f32 %v985, %v1038
          %v1048 = vadd.f32 %v986, %v1040
          %v1049 = vld [vmem:[#allocation3 + $0x9] sm:$0x1]
          %1050 = vset.pattern.permute.xlu0 9
          %1051 = vperm.xlu0 %1050, %v470
          %v1052 = vpop.permute.xlu0 %1051
          %1054 = vset.pattern.permute.xlu0 9
          %1055 = vperm.xlu0 %1054, %v471
          %v1056 = vpop.permute.xlu0 %1055
          %1058 = vset.pattern.permute.xlu0 9
          %1059 = vperm.xlu0 %1058, %v472
          %v1060 = vpop.permute.xlu0 %1059
          %1062 = vset.pattern.permute.xlu0 9
          %1063 = vperm.xlu0 %1062, %v473
          %v1064 = vpop.permute.xlu0 %1063
          %v1066 = vlaneseq
          %v1067 = vshrl.u32 %v1066, 7
          %v1068 = vsub.s32 0, %v1067
          %v1069 = vrot.slane %v1049, %v1068
          %v1070 = vmul.f32 %v1052, %v1069
          %v1071 = vmul.f32 %v1056, %v1069
          %v1072 = vmul.f32 %v1060, %v1069
          %v1073 = vmul.f32 %v1064, %v1069
          %v1074 = vadd.f32 %v1012, %v1070
          %v1075 = vadd.f32 %v1013, %v1071
          %v1076 = vadd.f32 %v1014, %v1072
          %v1077 = vadd.f32 %v1015, %v1073
          %v1078 = vld [vmem:[#allocation2 + $0xa] sm:$0x1]
          %v1079 = vlaneseq
          %v1080 = vshrl.u32 %v1079, 7
          %v1081 = vsub.s32 0, %v1080
          %v1082 = vrot.slane %v1078, %v1081
          %1084 = vrot.lane.b32.xlu0 %v1082, 10
          %v1085 = vpop.permute.xlu0 %1084
          %v1087 = vmul.f32 %v470, %v1085
          %v1088 = vmul.f32 %v471, %v1085
          %v1089 = vmul.f32 %v472, %v1085
          %v1090 = vmul.f32 %v473, %v1085
          %1095 = vrot.lane.b32.xlu0 %v1087, 118
          %v1096 = vpop.permute.xlu0 %1095
          %1097 = vrot.lane.b32.xlu0 %v1088, 118
          %v1098 = vpop.permute.xlu0 %1097
          %1099 = vrot.lane.b32.xlu0 %v1089, 118
          %v1100 = vpop.permute.xlu0 %1099
          %1101 = vrot.lane.b32.xlu0 %v1090, 118
          %v1102 = vpop.permute.xlu0 %1101
          %v1107 = vadd.f32 %v1045, %v1096
          %v1108 = vadd.f32 %v1046, %v1098
          %v1109 = vadd.f32 %v1047, %v1100
          %v1110 = vadd.f32 %v1048, %v1102
          %v1111 = vld [vmem:[#allocation3 + $0xa] sm:$0x1]
          %1112 = vset.pattern.permute.xlu0 10
          %1113 = vperm.xlu0 %1112, %v470
          %v1114 = vpop.permute.xlu0 %1113
          %1116 = vset.pattern.permute.xlu0 10
          %1117 = vperm.xlu0 %1116, %v471
          %v1118 = vpop.permute.xlu0 %1117
          %1120 = vset.pattern.permute.xlu0 10
          %1121 = vperm.xlu0 %1120, %v472
          %v1122 = vpop.permute.xlu0 %1121
          %1124 = vset.pattern.permute.xlu0 10
          %1125 = vperm.xlu0 %1124, %v473
          %v1126 = vpop.permute.xlu0 %1125
          %v1128 = vlaneseq
          %v1129 = vshrl.u32 %v1128, 7
          %v1130 = vsub.s32 0, %v1129
          %v1131 = vrot.slane %v1111, %v1130
          %v1132 = vmul.f32 %v1114, %v1131
          %v1133 = vmul.f32 %v1118, %v1131
          %v1134 = vmul.f32 %v1122, %v1131
          %v1135 = vmul.f32 %v1126, %v1131
          %v1136 = vadd.f32 %v1074, %v1132
          %v1137 = vadd.f32 %v1075, %v1133
          %v1138 = vadd.f32 %v1076, %v1134
          %v1139 = vadd.f32 %v1077, %v1135
          %v1140 = vld [vmem:[#allocation2 + $0xb] sm:$0x1]
          %v1141 = vlaneseq
          %v1142 = vshrl.u32 %v1141, 7
          %v1143 = vsub.s32 0, %v1142
          %v1144 = vrot.slane %v1140, %v1143
          %1146 = vrot.lane.b32.xlu0 %v1144, 11
          %v1147 = vpop.permute.xlu0 %1146
          %v1149 = vmul.f32 %v470, %v1147
          %v1150 = vmul.f32 %v471, %v1147
          %v1151 = vmul.f32 %v472, %v1147
          %v1152 = vmul.f32 %v473, %v1147
          %1157 = vrot.lane.b32.xlu0 %v1149, 117
          %v1158 = vpop.permute.xlu0 %1157
          %1159 = vrot.lane.b32.xlu0 %v1150, 117
          %v1160 = vpop.permute.xlu0 %1159
          %1161 = vrot.lane.b32.xlu0 %v1151, 117
          %v1162 = vpop.permute.xlu0 %1161
          %1163 = vrot.lane.b32.xlu0 %v1152, 117
          %v1164 = vpop.permute.xlu0 %1163
          %v1169 = vadd.f32 %v1107, %v1158
          %v1170 = vadd.f32 %v1108, %v1160
          %v1171 = vadd.f32 %v1109, %v1162
          %v1172 = vadd.f32 %v1110, %v1164
          %v1173 = vld [vmem:[#allocation3 + $0xb] sm:$0x1]
          %1174 = vset.pattern.permute.xlu0 11
          %1175 = vperm.xlu0 %1174, %v470
          %v1176 = vpop.permute.xlu0 %1175
          %1178 = vset.pattern.permute.xlu0 11
          %1179 = vperm.xlu0 %1178, %v471
          %v1180 = vpop.permute.xlu0 %1179
          %1182 = vset.pattern.permute.xlu0 11
          %1183 = vperm.xlu0 %1182, %v472
          %v1184 = vpop.permute.xlu0 %1183
          %1186 = vset.pattern.permute.xlu0 11
          %1187 = vperm.xlu0 %1186, %v473
          %v1188 = vpop.permute.xlu0 %1187
          %v1190 = vlaneseq
          %v1191 = vshrl.u32 %v1190, 7
          %v1192 = vsub.s32 0, %v1191
          %v1193 = vrot.slane %v1173, %v1192
          %v1194 = vmul.f32 %v1176, %v1193
          %v1195 = vmul.f32 %v1180, %v1193
          %v1196 = vmul.f32 %v1184, %v1193
          %v1197 = vmul.f32 %v1188, %v1193
          %v1198 = vadd.f32 %v1136, %v1194
          %v1199 = vadd.f32 %v1137, %v1195
          %v1200 = vadd.f32 %v1138, %v1196
          %v1201 = vadd.f32 %v1139, %v1197
          %v1202 = vld [vmem:[#allocation2 + $0xc] sm:$0x1]
          %v1203 = vlaneseq
          %v1204 = vshrl.u32 %v1203, 7
          %v1205 = vsub.s32 0, %v1204
          %v1206 = vrot.slane %v1202, %v1205
          %1208 = vrot.lane.b32.xlu0 %v1206, 12
          %v1209 = vpop.permute.xlu0 %1208
          %v1211 = vmul.f32 %v470, %v1209
          %v1212 = vmul.f32 %v471, %v1209
          %v1213 = vmul.f32 %v472, %v1209
          %v1214 = vmul.f32 %v473, %v1209
          %1219 = vrot.lane.b32.xlu0 %v1211, 116
          %v1220 = vpop.permute.xlu0 %1219
          %1221 = vrot.lane.b32.xlu0 %v1212, 116
          %v1222 = vpop.permute.xlu0 %1221
          %1223 = vrot.lane.b32.xlu0 %v1213, 116
          %v1224 = vpop.permute.xlu0 %1223
          %1225 = vrot.lane.b32.xlu0 %v1214, 116
          %v1226 = vpop.permute.xlu0 %1225
          %v1231 = vadd.f32 %v1169, %v1220
          %v1232 = vadd.f32 %v1170, %v1222
          %v1233 = vadd.f32 %v1171, %v1224
          %v1234 = vadd.f32 %v1172, %v1226
          %v1235 = vld [vmem:[#allocation3 + $0xc] sm:$0x1]
          %1236 = vset.pattern.permute.xlu0 12
          %1237 = vperm.xlu0 %1236, %v470
          %v1238 = vpop.permute.xlu0 %1237
          %1240 = vset.pattern.permute.xlu0 12
          %1241 = vperm.xlu0 %1240, %v471
          %v1242 = vpop.permute.xlu0 %1241
          %1244 = vset.pattern.permute.xlu0 12
          %1245 = vperm.xlu0 %1244, %v472
          %v1246 = vpop.permute.xlu0 %1245
          %1248 = vset.pattern.permute.xlu0 12
          %1249 = vperm.xlu0 %1248, %v473
          %v1250 = vpop.permute.xlu0 %1249
          %v1252 = vlaneseq
          %v1253 = vshrl.u32 %v1252, 7
          %v1254 = vsub.s32 0, %v1253
          %v1255 = vrot.slane %v1235, %v1254
          %v1256 = vmul.f32 %v1238, %v1255
          %v1257 = vmul.f32 %v1242, %v1255
          %v1258 = vmul.f32 %v1246, %v1255
          %v1259 = vmul.f32 %v1250, %v1255
          %v1260 = vadd.f32 %v1198, %v1256
          %v1261 = vadd.f32 %v1199, %v1257
          %v1262 = vadd.f32 %v1200, %v1258
          %v1263 = vadd.f32 %v1201, %v1259
          %v1264 = vld [vmem:[#allocation2 + $0xd] sm:$0x1]
          %v1265 = vlaneseq
          %v1266 = vshrl.u32 %v1265, 7
          %v1267 = vsub.s32 0, %v1266
          %v1268 = vrot.slane %v1264, %v1267
          %1270 = vrot.lane.b32.xlu0 %v1268, 13
          %v1271 = vpop.permute.xlu0 %1270
          %v1273 = vmul.f32 %v470, %v1271
          %v1274 = vmul.f32 %v471, %v1271
          %v1275 = vmul.f32 %v472, %v1271
          %v1276 = vmul.f32 %v473, %v1271
          %1281 = vrot.lane.b32.xlu0 %v1273, 115
          %v1282 = vpop.permute.xlu0 %1281
          %1283 = vrot.lane.b32.xlu0 %v1274, 115
          %v1284 = vpop.permute.xlu0 %1283
          %1285 = vrot.lane.b32.xlu0 %v1275, 115
          %v1286 = vpop.permute.xlu0 %1285
          %1287 = vrot.lane.b32.xlu0 %v1276, 115
          %v1288 = vpop.permute.xlu0 %1287
          %v1293 = vadd.f32 %v1231, %v1282
          %v1294 = vadd.f32 %v1232, %v1284
          %v1295 = vadd.f32 %v1233, %v1286
          %v1296 = vadd.f32 %v1234, %v1288
          %v1297 = vld [vmem:[#allocation3 + $0xd] sm:$0x1]
          %1298 = vset.pattern.permute.xlu0 13
          %1299 = vperm.xlu0 %1298, %v470
          %v1300 = vpop.permute.xlu0 %1299
          %1302 = vset.pattern.permute.xlu0 13
          %1303 = vperm.xlu0 %1302, %v471
          %v1304 = vpop.permute.xlu0 %1303
          %1306 = vset.pattern.permute.xlu0 13
          %1307 = vperm.xlu0 %1306, %v472
          %v1308 = vpop.permute.xlu0 %1307
          %1310 = vset.pattern.permute.xlu0 13
          %1311 = vperm.xlu0 %1310, %v473
          %v1312 = vpop.permute.xlu0 %1311
          %v1314 = vlaneseq
          %v1315 = vshrl.u32 %v1314, 7
          %v1316 = vsub.s32 0, %v1315
          %v1317 = vrot.slane %v1297, %v1316
          %v1318 = vmul.f32 %v1300, %v1317
          %v1319 = vmul.f32 %v1304, %v1317
          %v1320 = vmul.f32 %v1308, %v1317
          %v1321 = vmul.f32 %v1312, %v1317
          %v1322 = vadd.f32 %v1260, %v1318
          %v1323 = vadd.f32 %v1261, %v1319
          %v1324 = vadd.f32 %v1262, %v1320
          %v1325 = vadd.f32 %v1263, %v1321
          %v1326 = vld [vmem:[#allocation2 + $0xe] sm:$0x1]
          %v1327 = vlaneseq
          %v1328 = vshrl.u32 %v1327, 7
          %v1329 = vsub.s32 0, %v1328
          %v1330 = vrot.slane %v1326, %v1329
          %1332 = vrot.lane.b32.xlu0 %v1330, 14
          %v1333 = vpop.permute.xlu0 %1332
          %v1335 = vmul.f32 %v470, %v1333
          %v1336 = vmul.f32 %v471, %v1333
          %v1337 = vmul.f32 %v472, %v1333
          %v1338 = vmul.f32 %v473, %v1333
          %1343 = vrot.lane.b32.xlu0 %v1335, 114
          %v1344 = vpop.permute.xlu0 %1343
          %1345 = vrot.lane.b32.xlu0 %v1336, 114
          %v1346 = vpop.permute.xlu0 %1345
          %1347 = vrot.lane.b32.xlu0 %v1337, 114
          %v1348 = vpop.permute.xlu0 %1347
          %1349 = vrot.lane.b32.xlu0 %v1338, 114
          %v1350 = vpop.permute.xlu0 %1349
          %v1355 = vadd.f32 %v1293, %v1344
          %v1356 = vadd.f32 %v1294, %v1346
          %v1357 = vadd.f32 %v1295, %v1348
          %v1358 = vadd.f32 %v1296, %v1350
          %v1359 = vld [vmem:[#allocation3 + $0xe] sm:$0x1]
          %1360 = vset.pattern.permute.xlu0 14
          %1361 = vperm.xlu0 %1360, %v470
          %v1362 = vpop.permute.xlu0 %1361
          %1364 = vset.pattern.permute.xlu0 14
          %1365 = vperm.xlu0 %1364, %v471
          %v1366 = vpop.permute.xlu0 %1365
          %1368 = vset.pattern.permute.xlu0 14
          %1369 = vperm.xlu0 %1368, %v472
          %v1370 = vpop.permute.xlu0 %1369
          %1372 = vset.pattern.permute.xlu0 14
          %1373 = vperm.xlu0 %1372, %v473
          %v1374 = vpop.permute.xlu0 %1373
          %v1376 = vlaneseq
          %v1377 = vshrl.u32 %v1376, 7
          %v1378 = vsub.s32 0, %v1377
          %v1379 = vrot.slane %v1359, %v1378
          %v1380 = vmul.f32 %v1362, %v1379
          %v1381 = vmul.f32 %v1366, %v1379
          %v1382 = vmul.f32 %v1370, %v1379
          %v1383 = vmul.f32 %v1374, %v1379
          %v1384 = vadd.f32 %v1322, %v1380
          %v1385 = vadd.f32 %v1323, %v1381
          %v1386 = vadd.f32 %v1324, %v1382
          %v1387 = vadd.f32 %v1325, %v1383
          %v1388 = vld [vmem:[#allocation2 + $0xf] sm:$0x1]
          %v1389 = vlaneseq
          %v1390 = vshrl.u32 %v1389, 7
          %v1391 = vsub.s32 0, %v1390
          %v1392 = vrot.slane %v1388, %v1391
          %1394 = vrot.lane.b32.xlu0 %v1392, 15
          %v1395 = vpop.permute.xlu0 %1394
          %v1397 = vmul.f32 %v470, %v1395
          %v1398 = vmul.f32 %v471, %v1395
          %v1399 = vmul.f32 %v472, %v1395
          %v1400 = vmul.f32 %v473, %v1395
          %1405 = vrot.lane.b32.xlu0 %v1397, 113
          %v1406 = vpop.permute.xlu0 %1405
          %1407 = vrot.lane.b32.xlu0 %v1398, 113
          %v1408 = vpop.permute.xlu0 %1407
          %1409 = vrot.lane.b32.xlu0 %v1399, 113
          %v1410 = vpop.permute.xlu0 %1409
          %1411 = vrot.lane.b32.xlu0 %v1400, 113
          %v1412 = vpop.permute.xlu0 %1411
          %v1417 = vadd.f32 %v1355, %v1406
          %v1418 = vadd.f32 %v1356, %v1408
          %v1419 = vadd.f32 %v1357, %v1410
          %v1420 = vadd.f32 %v1358, %v1412
          %v1421 = vld [vmem:[#allocation3 + $0xf] sm:$0x1]
          %1422 = vset.pattern.permute.xlu0 15
          %1423 = vperm.xlu0 %1422, %v470
          %v1424 = vpop.permute.xlu0 %1423
          %1426 = vset.pattern.permute.xlu0 15
          %1427 = vperm.xlu0 %1426, %v471
          %v1428 = vpop.permute.xlu0 %1427
          %1430 = vset.pattern.permute.xlu0 15
          %1431 = vperm.xlu0 %1430, %v472
          %v1432 = vpop.permute.xlu0 %1431
          %1434 = vset.pattern.permute.xlu0 15
          %1435 = vperm.xlu0 %1434, %v473
          %v1436 = vpop.permute.xlu0 %1435
          %v1438 = vlaneseq
          %v1439 = vshrl.u32 %v1438, 7
          %v1440 = vsub.s32 0, %v1439
          %v1441 = vrot.slane %v1421, %v1440
          %v1442 = vmul.f32 %v1424, %v1441
          %v1443 = vmul.f32 %v1428, %v1441
          %v1444 = vmul.f32 %v1432, %v1441
          %v1445 = vmul.f32 %v1436, %v1441
          %v1446 = vadd.f32 %v1384, %v1442
          %v1447 = vadd.f32 %v1385, %v1443
          %v1448 = vadd.f32 %v1386, %v1444
          %v1449 = vadd.f32 %v1387, %v1445
          %v1450 = vmul.f32 %v1417, 0.09090909
          %v1451 = vmul.f32 %v1418, 0.09090909
          %v1452 = vmul.f32 %v1419, 0.09090909
          %v1453 = vmul.f32 %v1420, 0.09090909
          %v1454 = vmul.f32 %v1446, %v470
          %v1455 = vmul.f32 %v1447, %v471
          %v1456 = vmul.f32 %v1448, %v472
          %v1457 = vmul.f32 %v1449, %v473
          %v1458 = vsel %vm464, %v1454, 0.0
          %1459 = vadd.xlane.f32.xlu0 %v1458
          %v1460 = vpop.xlane.xlu0 %1459
          %v1461 = vsel %vm464, %v1455, 0.0
          %1462 = vadd.xlane.f32.xlu0 %v1461
          %v1463 = vpop.xlane.xlu0 %1462
          %v1464 = vsel %vm464, %v1456, 0.0
          %1465 = vadd.xlane.f32.xlu0 %v1464
          %v1466 = vpop.xlane.xlu0 %1465
          %v1467 = vsel %vm464, %v1457, 0.0
          %1468 = vadd.xlane.f32.xlu0 %v1467
          %v1469 = vpop.xlane.xlu0 %1468
          %v1470 = vmul.f32 %v1460, 0.09090909
          %v1471 = vmul.f32 %v1463, 0.09090909
          %v1472 = vmul.f32 %v1466, 0.09090909
          %v1473 = vmul.f32 %v1469, 0.09090909
          %v1474 = vmul.f32 %v1450, %v1450
          %v1475 = vmul.f32 %v1451, %v1451
          %v1476 = vmul.f32 %v1452, %v1452
          %v1477 = vmul.f32 %v1453, %v1453
          %v1478 = vsub.f32 %v1470, %v1474
          %v1479 = vsub.f32 %v1471, %v1475
          %v1480 = vsub.f32 %v1472, %v1476
          %v1481 = vsub.f32 %v1473, %v1477
          %v1482 = vmax.f32 %v1478, 0.0
          %v1483 = vmax.f32 %v1479, 0.0
          %v1484 = vmax.f32 %v1480, 0.0
          %v1485 = vmax.f32 %v1481, 0.0
          %v1486 = vld [vmem:[#allocation9] sm:$0xff]
          %v1487 = vld [vmem:[#allocation9 + $0x8] sm:$0xff]
          %v1488 = vld [vmem:[#allocation9 + $0x10] sm:$0xff]
          %v1489 = vld [vmem:[#allocation9 + $0x18] sm:$0xff]
          %v1490 = vadd.f32 %v1482, 1e-05
          %v1491 = vadd.f32 %v1483, 1e-05
          %v1492 = vadd.f32 %v1484, 1e-05
          %v1493 = vadd.f32 %v1485, 1e-05
          %v1494 = vrsqrt.pop %v1490
          %v1495 = vrsqrt.pop %v1491
          %v1496 = vrsqrt.pop %v1492
          %v1497 = vrsqrt.pop %v1493
          %v1498 = vmul.f32 %v1486, %v1494
          %v1499 = vmul.f32 %v1487, %v1495
          %v1500 = vmul.f32 %v1488, %v1496
          %v1501 = vmul.f32 %v1489, %v1497
          %v1502 = vmul.f32 %v1450, %v1498
          %v1503 = vmul.f32 %v1451, %v1499
          %v1504 = vmul.f32 %v1452, %v1500
          %v1505 = vmul.f32 %v1453, %v1501
          %1510 = vrot.lane.b32.xlu0 %v1502, 1
          %v1511 = vpop.permute.xlu0 %1510
          %1512 = vrot.lane.b32.xlu0 %v1503, 1
          %v1513 = vpop.permute.xlu0 %1512
          %1514 = vrot.lane.b32.xlu0 %v1504, 1
          %v1515 = vpop.permute.xlu0 %1514
          %1516 = vrot.lane.b32.xlu0 %v1505, 1
          %v1517 = vpop.permute.xlu0 %1516
          %v1522 = vsub.f32 %v1486, %v1511
          %v1523 = vsub.f32 %v1487, %v1513
          %v1524 = vsub.f32 %v1488, %v1515
          %v1525 = vsub.f32 %v1489, %v1517
          %v1526 = vsel %vm253, %v1498, %v1522
          %v1527 = vsel %vm253, %v1499, %v1523
          %v1528 = vsel %vm253, %v1500, %v1524
          %v1529 = vsel %vm253, %v1501, %v1525
          %1530 = vst.msk [vmem:[%s232] sm:$0xff] %vm420, %v1526
          %1531 = vst.msk [vmem:[%s232 + $0x8] sm:$0xff] %vm420, %v1527
          %1532 = vst.msk [vmem:[%s232 + $0x10] sm:$0xff] %vm420, %v1528
          %1533 = vst.msk [vmem:[%s232 + $0x18] sm:$0xff] %vm420, %v1529
        $region52: #{tpu_custom_call.1} parent=31 // pred_fallthru
          _
        %s1534 = sand.u32 %s111, 1
        %s1535 = scalar_lea.sflag [#allocation6], %s1534
        %s1536 = sand.u32 %s111, 1
        %s1537 = smul.addr %s1536, 32
        %s1538 = scalar_lea.vmem [#allocation10], %s1537
        // Predicated region
        $region53: #{tpu_custom_call.1} parent=31 // pred_check
          %p1539 = pneg %p121
        $region54: #{tpu_custom_call.1} parent=31 // pred_check_branch
          %1541 = sbr.rel (%p1539) target = $region56
        $region55: #{tpu_custom_call.1} parent=31 // pred_region
          %s1543 = ssub.s32 512, 512
          %1544 = vsyncadd %s1535, %s1543
          %s1545 = smul.addr %s25, 4
          %s1546 = smul.addr %s1545, 128
          %s1547 = scalar_lea.hbm %s3, %s1546
          %s1548 = sshll.u32 %s1538, 4
          %s1549 = int_to_ptr.vmem [resolvable:$true] %s1548
          %1554 = dma.vmem_to_hbm [thread:$0]  %s1549, 512, %s1547, %s1535, 128, 128, 8
        $region56: #{tpu_custom_call.1} parent=31 // pred_fallthru
          _
      $region32: #{tpu_custom_call.1} parent=5 // pred_fallthru
        _
      %p1555 = scmp.le.s32.totalorder 2, %s16
      // Predicated region
      $region57: #{tpu_custom_call.1} parent=5 // pred_check
        %p1556 = pneg %p1555
      $region58: #{tpu_custom_call.1} parent=5 // pred_check_branch
        %1558 = sbr.rel (%p1556) target = $region60
      $region59: #{tpu_custom_call.1} parent=5 // pred_region
        %s1559 = ssub.s32 %s16, 2
        // Predicated region
        $region61: #{tpu_custom_call.1} parent=59 // pred_check
          %p1560 = pneg %p127
        $region62: #{tpu_custom_call.1} parent=59 // pred_check_branch
          %1562 = sbr.rel (%p1560) target = $region64
        $region63: #{tpu_custom_call.1} parent=59 // pred_region
          %s1563 = sand.u32 %s112, 1
          %s1564 = scalar_lea.sflag [#allocation6], %s1563
          %s1565 = sand.u32 %s112, 1
          %s1566 = smul.addr %s1565, 32
          %s1567 = scalar_lea.vmem [#allocation10], %s1566
          %1568 = dma.done %s1564, 512
        $region64: #{tpu_custom_call.1} parent=59 // pred_fallthru
          _
      $region60: #{tpu_custom_call.1} parent=5 // pred_fallthru
        _
    $region6: #{tpu_custom_call.1} parent=1 // loop_footer
      %s20 = sadd.s32 1, %s16
    $region7: #{tpu_custom_call.1} parent=1 // loop_footer_branch
      %15 = sbr.rel target = $region3
    $region8: #{tpu_custom_call.1} parent=1 // loop_exit
      _
    %1569 = vsyncpa [#allocation5], 1
    %s1570 = scalar_lea.sflag [#allocation5], 1
    %1571 = vsyncpa %s1570, 1
    %1572 = vsyncpa [#allocation8], 1
    %1573 = vsyncpa [#allocation6], 1
    %s1574 = scalar_lea.sflag [#allocation6], 1
    %1575 = vsyncpa %s1574, 1

</llo_original>
